<compile_context>
chip_gen: v7x
topology: tpu7x:2x2x1
jax: 0.10.0
libtpu: 0.0.40
codegen_flags: <defaults>
</compile_context>

<pallas_src>
import jax
import jax.numpy as jnp
from jax.experimental import pallas as pl
from jax.experimental.pallas import tpu as pltpu


# ----------------------------------------------------------------------------
# Kernels
# ----------------------------------------------------------------------------
def _ae_kernel_resident(x_ref, w_enc_ref, b_enc_ref, w_dec_ref, b_dec_ref,
                        out_ref):
    """Both weight matrices resident in VMEM; one batch tile per grid step."""
    # encoder: bf16 inputs on the MXU, f32 accumulation
    h = jnp.dot(x_ref[...], w_enc_ref[...], preferred_element_type=jnp.float32)
    # bias add + ReLU stay in f32 on the VPU (biases are stored in f32)
    h = jnp.maximum(h + b_enc_ref[...], 0.0)
    # decoder: feed bf16 into the MXU, accumulate in f32
    y = jnp.dot(h.astype(w_dec_ref.dtype), w_dec_ref[...],
                preferred_element_type=jnp.float32)
    out_ref[...] = (y + b_dec_ref[...]).astype(out_ref.dtype)


def _ae_kernel_htiled(x_ref, w_enc_ref, b_enc_ref, w_dec_ref, b_dec_ref,
                      out_ref, acc_ref):
    """Hidden dim streamed in TH chunks; f32 accumulator lives in VMEM scratch.

    Correct because ReLU is elementwise per hidden unit:
      sum_h relu(x @ Wenc[:, h] + b_enc[h]) @ Wdec[h, :]  ==  full forward.
    """
    hstep = pl.program_id(1)

    @pl.when(hstep == 0)
    def _():
        acc_ref[...] = jnp.zeros_like(acc_ref)

    h = jnp.dot(x_ref[...], w_enc_ref[...], preferred_element_type=jnp.float32)
    h = jnp.maximum(h + b_enc_ref[...], 0.0)
    acc_ref[...] += jnp.dot(h.astype(w_dec_ref.dtype), w_dec_ref[...],
                            preferred_element_type=jnp.float32)

    @pl.when(hstep == pl.num_programs(1) - 1)
    def _():
        out_ref[...] = (acc_ref[...] + b_dec_ref[...]).astype(out_ref.dtype)


# ----------------------------------------------------------------------------
# Parameter preparation (one-time, at load)
# ----------------------------------------------------------------------------
def prepare_params(w_enc, b_enc, w_dec, b_dec, *, compute_dtype=jnp.bfloat16,
                   hidden_pad_multiple=256):
    """Convert PyTorch nn.Linear layouts ((out, in) weights, (out,) biases)
    into the kernel's resident layouts ONCE:

        w_enc_t : (D_in, Hp)  compute_dtype     b_enc_2d : (1, Hp)   f32
        w_dec_t : (Hp, D_in)  compute_dtype     b_dec_2d : (1, D_in) f32

    The hidden dim is zero-padded to a multiple of `hidden_pad_multiple`
    (semantics preserving: relu(x@0 + 0) = 0 and the zero decoder rows
    contribute nothing), which fills the 2x256x256 MXU on v6e/v7x and makes
    hidden-dim tiling divide cleanly.
    """
    w_enc = jnp.asarray(w_enc, jnp.float32)
    b_enc = jnp.asarray(b_enc, jnp.float32)
    w_dec = jnp.asarray(w_dec, jnp.float32)
    b_dec = jnp.asarray(b_dec, jnp.float32)
    H, D_in = w_enc.shape
    m = hidden_pad_multiple
    Hp = max(m, ((H + m - 1) // m) * m)
    pad = Hp - H
    w_enc_t = jnp.pad(w_enc.T, ((0, 0), (0, pad)))           # (D_in, Hp)
    b_enc_2d = jnp.pad(b_enc, (0, pad)).reshape(1, Hp)        # (1, Hp)  f32
    w_dec_t = jnp.pad(w_dec.T, ((0, pad), (0, 0)))            # (Hp, D_in)
    b_dec_2d = b_dec.reshape(1, D_in)                         # (1, D_in) f32
    return (w_enc_t.astype(compute_dtype), b_enc_2d,
            w_dec_t.astype(compute_dtype), b_dec_2d)


# ----------------------------------------------------------------------------
# Tiling plan
# ----------------------------------------------------------------------------
def _vmem_capacity_bytes():
    try:
        return int(pltpu.get_tpu_info().vmem_capacity_bytes)
    except Exception:
        return 128 * 1024 * 1024  # v5e/v6e default


def _plan(B, D_in, H, isz, budget):
    """Pick (mode, TM, TH).

    'resident': both weight matrices stay in VMEM, single-buffered.
    'htiled'  : hidden dim streamed in TH-wide, double-buffered chunks.
    """
    tm_candidates = [c for c in (512, 256, 128, 64, 32, 16, 8) if c <= B] or [B]

    # ---- resident-weights path (weights single-buffered via pl.Buffered(1))
    resident = 2 * D_in * H * isz + (H + D_in) * 4
    for tm in tm_candidates:
        tile = (2 * tm * D_in * isz       # x double buffer (compute dtype)
                + 2 * tm * D_in * 4       # out double buffer (f32)
                + tm * H * 4              # encoder activation (f32)
                + tm * D_in * 4)          # decoder result (f32)
        if resident + tile <= budget:
            # v7x: guarantee >= 2 steps on the "parallel" batch axis so both
            # TensorCores get work (and DMA/compute can overlap).
            if B >= 512 and -(-B // tm) < 2:
                tm = 256
            return "resident", tm, H

    # ---- hidden-dim streamed path (weights too large to stay resident)
    for tm in tm_candidates:
        for th in (1024, 512, 256, 128):
            if H % th != 0:
                continue
            per_step = (2 * (2 * D_in * th * isz)   # both weight chunks, dbl buf
                        + 2 * th * 4 + D_in * 4     # bias blocks (f32)
                        + 2 * tm * D_in * isz       # x double buffer
                        + 2 * tm * D_in * 4         # out double buffer
                        + tm * D_in * 4             # f32 accumulator scratch
                        + tm * th * 4)              # encoder activation (f32)
            if per_step <= budget:
                return "htiled", tm, th
    raise ValueError(
        f"Autoencoder layer (D_in={D_in}, H={H}) does not fit the VMEM budget "
        f"({budget} bytes) even with hidden-dim tiling.")


# ----------------------------------------------------------------------------
# pallas_call builders
# ----------------------------------------------------------------------------
def _call_resident(xc, w_enc, b_enc, w_dec, b_dec, out_dtype, TM, D_in, H,
                   cost, vmem_cap):
    Bp = xc.shape[0]
    isz = jnp.dtype(xc.dtype).itemsize
    footprint = (2 * D_in * H * isz + (H + D_in) * 4
                 + 2 * TM * D_in * isz + 2 * TM * D_in * 4
                 + TM * H * 4 + TM * D_in * 4)
    vmem_limit = int(min(max(footprint + (2 << 20), 16 << 20), vmem_cap))

    def build(single_buffer_weights):
        def const_spec(shape):
            if single_buffer_weights:
                return pl.BlockSpec(shape, lambda i: (0, 0),
                                    pipeline_mode=pl.Buffered(1))
            return pl.BlockSpec(shape, lambda i: (0, 0))

        return pl.pallas_call(
            _ae_kernel_resident,
            out_shape=jax.ShapeDtypeStruct((Bp, D_in), out_dtype),
            grid_spec=pltpu.PrefetchScalarGridSpec(
                num_scalar_prefetch=0,
                grid=(Bp // TM,),
                in_specs=[
                    pl.BlockSpec((TM, D_in), lambda i: (i, 0)),  # x: batch-tiled
                    const_spec((D_in, H)),                       # w_enc resident
                    const_spec((1, H)),                          # b_enc resident
                    const_spec((H, D_in)),                       # w_dec resident
                    const_spec((1, D_in)),                       # b_dec resident
                ],
                out_specs=pl.BlockSpec((TM, D_in), lambda i: (i, 0)),
            ),
            compiler_params=pltpu.CompilerParams(
                dimension_semantics=("parallel",),
                vmem_limit_bytes=vmem_limit,
            ),
            cost_estimate=cost,
        )

    try:
        return build(True)(xc, w_enc, b_enc, w_dec, b_dec)
    except Exception:
        # Fallback for jax versions that reject pipeline_mode=pl.Buffered(1);
        # index_maps are constant so the data is still DMA'd only once.
        return build(False)(xc, w_enc, b_enc, w_dec, b_dec)


def _call_htiled(xc, w_enc, b_enc, w_dec, b_dec, out_dtype, TM, TH, D_in, H,
                 cost, vmem_cap):
    Bp = xc.shape[0]
    isz = jnp.dtype(xc.dtype).itemsize
    footprint = (2 * (2 * D_in * TH * isz) + 2 * TH * 4 + D_in * 4
                 + 2 * TM * D_in * isz + 2 * TM * D_in * 4
                 + TM * D_in * 4 + TM * TH * 4)
    vmem_limit = int(min(max(footprint + (2 << 20), 16 << 20), vmem_cap))

    return pl.pallas_call(
        _ae_kernel_htiled,
        out_shape=jax.ShapeDtypeStruct((Bp, D_in), out_dtype),
        grid_spec=pltpu.PrefetchScalarGridSpec(
            num_scalar_prefetch=0,
            grid=(Bp // TM, H // TH),
            in_specs=[
                pl.BlockSpec((TM, D_in), lambda i, h: (i, 0)),   # x (revisited)
                pl.BlockSpec((D_in, TH), lambda i, h: (0, h)),   # w_enc chunk
                pl.BlockSpec((1, TH), lambda i, h: (0, h)),      # b_enc chunk
                pl.BlockSpec((TH, D_in), lambda i, h: (h, 0)),   # w_dec chunk
                pl.BlockSpec((1, D_in), lambda i, h: (0, 0)),    # b_dec resident
            ],
            out_specs=pl.BlockSpec((TM, D_in), lambda i, h: (i, 0)),
            scratch_shapes=[pltpu.VMEM((TM, D_in), jnp.float32)],
        ),
        compiler_params=pltpu.CompilerParams(
            dimension_semantics=("parallel", "arbitrary"),
            vmem_limit_bytes=vmem_limit,
        ),
        cost_estimate=cost,
    )(xc, w_enc, b_enc, w_dec, b_dec)


# ----------------------------------------------------------------------------
# Public wrapper
# ----------------------------------------------------------------------------
def autoencoder_forward(x, w_enc_t, b_enc_2d, w_dec_t, b_dec_2d):
    """x: (B, D_in). Params already in kernel layout (see prepare_params).
    Returns decoded (B, D_in) in x.dtype."""
    out_dtype = x.dtype
    B, D_in = x.shape
    H = w_enc_t.shape[1]
    compute_dtype = w_enc_t.dtype
    isz = jnp.dtype(compute_dtype).itemsize

    capacity = _vmem_capacity_bytes()
    # ~48 MiB tile budget on v7x (64 MiB physical), ~96 MiB on v5e/v6e (128 MiB)
    budget = min(int(capacity * 0.75), 100 * 1024 * 1024)
    # Compiler scoped-VMEM cap: never the full physical size (headroom for
    # compiler-internal scratch), and never above 100 MiB.
    vmem_cap = min(int(capacity * 0.8), 100 * 1024 * 1024)

    mode, TM, TH = _plan(B, D_in, H, isz, budget)

    # Explicit batch-tail handling: pad to a TM multiple so every tile is
    # full-width (no masked partial stores), then slice the result back.
    Bp = -(-B // TM) * TM
    xc = x.astype(compute_dtype)
    if Bp != B:
        xc = jnp.pad(xc, ((0, Bp - B), (0, 0)))

    cost = pl.CostEstimate(
        flops=int(4 * Bp * D_in * H),                       # two matmuls
        transcendentals=0,
        bytes_accessed=int(Bp * D_in * (isz + jnp.dtype(out_dtype).itemsize)
                           + 2 * D_in * H * isz + (H + D_in) * 4),
    )

    if mode == "resident":
        out = _call_resident(xc, w_enc_t, b_enc_2d, w_dec_t, b_dec_2d,
                             out_dtype, TM, D_in, H, cost, vmem_cap)
    else:
        out = _call_htiled(xc, w_enc_t, b_enc_2d, w_dec_t, b_dec_2d,
                           out_dtype, TM, TH, D_in, H, cost, vmem_cap)

    return out[:B] if Bp != B else out


def _reference(x, w_enc, b_enc, w_dec, b_dec):
    h = jnp.maximum(x @ w_enc.T + b_enc, 0.0)
    return h @ w_dec.T + b_dec


if __name__ == "__main__":
    # Small, TPU-friendly demo sizes (trailing dims multiples of 128; hidden
    # is 256-aligned to fill the v6e/v7x MXU).
    batch = 64
    input_dim = 256
    hidden_dim = 256

    key = jax.random.PRNGKey(0)
    kx, k1, k2, k3, k4 = jax.random.split(key, 5)

    x = jax.random.normal(kx, (batch, input_dim), dtype=jnp.float32)

    # Deterministic init mimicking nn.Linear: U(-1/sqrt(fan_in), 1/sqrt(fan_in))
    enc_bound = 1.0 / (input_dim ** 0.5)
    dec_bound = 1.0 / (hidden_dim ** 0.5)
    w_enc = jax.random.uniform(k1, (hidden_dim, input_dim), jnp.float32,
                               minval=-enc_bound, maxval=enc_bound)
    b_enc = jax.random.uniform(k2, (hidden_dim,), jnp.float32,
                               minval=-enc_bound, maxval=enc_bound)
    w_dec = jax.random.uniform(k3, (input_dim, hidden_dim), jnp.float32,
                               minval=-dec_bound, maxval=dec_bound)
    b_dec = jax.random.uniform(k4, (input_dim,), jnp.float32,
                               minval=-dec_bound, maxval=dec_bound)

    # One-time layout conversion + bf16 cast (no per-call transposes).
    params = prepare_params(w_enc, b_enc, w_dec, b_dec)

    out = autoencoder_forward(x, *params)
    out = jax.block_until_ready(out)

    # Validate against the f32 reference; tolerance relaxed for the bf16 MXU path.
    ref = _reference(x, w_enc, b_enc, w_dec, b_dec)
    assert out.shape == (batch, input_dim)
    assert jnp.allclose(out, ref, atol=5e-2, rtol=5e-2), "mismatch vs reference"

    print("KERNEL_OK")
</pallas_src>

<mosaic_0001>
module attributes {stable_mosaic.version = 11 : i64} {
  func.func @_ae_kernel_resident(%arg0: i32, %arg1: memref<64x256xbf16, #tpu.memory_space<vmem>>, %arg2: memref<256x256xbf16, #tpu.memory_space<vmem>>, %arg3: memref<1x256xf32, #tpu.memory_space<vmem>>, %arg4: memref<256x256xbf16, #tpu.memory_space<vmem>>, %arg5: memref<1x256xf32, #tpu.memory_space<vmem>>, %arg6: memref<64x256xf32, #tpu.memory_space<vmem>>) attributes {dimension_semantics = [#tpu.dimension_semantics<parallel>], iteration_bounds = array<i64: 1>, scalar_prefetch = 0 : i64, scratch_operands = 0 : i64, tpu.core_type = #tpu.core_type<tc>, window_params = [{transform_indices = @transform_0, window_bounds = array<i64: 64, 256>}, {pipeline_mode = #tpu.pipeline_mode<synchronous>, transform_indices = @transform_1, window_bounds = array<i64: 256, 256>}, {pipeline_mode = #tpu.pipeline_mode<synchronous>, transform_indices = @transform_2, window_bounds = array<i64: 1, 256>}, {pipeline_mode = #tpu.pipeline_mode<synchronous>, transform_indices = @transform_3, window_bounds = array<i64: 256, 256>}, {pipeline_mode = #tpu.pipeline_mode<synchronous>, transform_indices = @transform_4, window_bounds = array<i64: 1, 256>}, {transform_indices = @transform_5, window_bounds = array<i64: 64, 256>}]} {
    %c0 = arith.constant 0 : index
    %c0_0 = arith.constant 0 : index
    %0 = vector.load %arg1[%c0, %c0_0] : memref<64x256xbf16, #tpu.memory_space<vmem>>, vector<64x256xbf16>
    %c0_1 = arith.constant 0 : index
    %c0_2 = arith.constant 0 : index
    %1 = vector.load %arg2[%c0_1, %c0_2] : memref<256x256xbf16, #tpu.memory_space<vmem>>, vector<256x256xbf16>
    %cst = arith.constant dense<0.000000e+00> : vector<64x256xf32>
    %2 = tpu.matmul %0, %1, %cst {dimension_numbers = #tpu.dot_dimension_numbers<[1], [0], [0], [1], [0, 0, 1, 1], [], []>} : vector<64x256xbf16>, vector<256x256xbf16>, vector<64x256xf32> -> vector<64x256xf32>
    %c0_3 = arith.constant 0 : index
    %c0_4 = arith.constant 0 : index
    %3 = vector.load %arg3[%c0_3, %c0_4] : memref<1x256xf32, #tpu.memory_space<vmem>>, vector<1x256xf32>
    %4 = vector.broadcast %3 : vector<1x256xf32> to vector<64x256xf32>
    %5 = arith.addf %2, %4 : vector<64x256xf32>
    %cst_5 = arith.constant 0.000000e+00 : f32
    %6 = vector.broadcast %cst_5 : f32 to vector<64x256xf32>
    %7 = arith.maximumf %5, %6 : vector<64x256xf32>
    %8 = arith.truncf %7 : vector<64x256xf32> to vector<64x256xbf16>
    %c0_6 = arith.constant 0 : index
    %c0_7 = arith.constant 0 : index
    %9 = vector.load %arg4[%c0_6, %c0_7] : memref<256x256xbf16, #tpu.memory_space<vmem>>, vector<256x256xbf16>
    %cst_8 = arith.constant dense<0.000000e+00> : vector<64x256xf32>
    %10 = tpu.matmul %8, %9, %cst_8 {dimension_numbers = #tpu.dot_dimension_numbers<[1], [0], [0], [1], [0, 0, 1, 1], [], []>} : vector<64x256xbf16>, vector<256x256xbf16>, vector<64x256xf32> -> vector<64x256xf32>
    %c0_9 = arith.constant 0 : index
    %c0_10 = arith.constant 0 : index
    %11 = vector.load %arg5[%c0_9, %c0_10] : memref<1x256xf32, #tpu.memory_space<vmem>>, vector<1x256xf32>
    %12 = vector.broadcast %11 : vector<1x256xf32> to vector<64x256xf32>
    %13 = arith.addf %10, %12 : vector<64x256xf32>
    %c0_11 = arith.constant 0 : index
    %c0_12 = arith.constant 0 : index
    %14 = vector.load %arg6[%c0_11, %c0_12] : memref<64x256xf32, #tpu.memory_space<vmem>>, vector<64x256xf32>
    tpu.vector_store %arg6[%c0_11, %c0_12], %13 {strides = array<i32>} : memref<64x256xf32, #tpu.memory_space<vmem>>, vector<64x256xf32>,
    return
  }
  func.func @transform_0(%arg0: i32) -> (i32, i32) {
    %c0_i32 = arith.constant 0 : i32
    %c0_i32_0 = arith.constant 0 : i32
    return %arg0, %c0_i32 : i32, i32
  }
  func.func @transform_1(%arg0: i32) -> (i32, i32) {
    %c0_i32 = arith.constant 0 : i32
    %c0_i32_0 = arith.constant 0 : i32
    %c0_i32_1 = arith.constant 0 : i32
    return %c0_i32, %c0_i32_0 : i32, i32
  }
  func.func @transform_2(%arg0: i32) -> (i32, i32) {
    %c0_i32 = arith.constant 0 : i32
    %c0_i32_0 = arith.constant 0 : i32
    %c0_i32_1 = arith.constant 0 : i32
    return %c0_i32, %c0_i32_0 : i32, i32
  }
  func.func @transform_3(%arg0: i32) -> (i32, i32) {
    %c0_i32 = arith.constant 0 : i32
    %c0_i32_0 = arith.constant 0 : i32
    %c0_i32_1 = arith.constant 0 : i32
    return %c0_i32, %c0_i32_0 : i32, i32
  }
  func.func @transform_4(%arg0: i32) -> (i32, i32) {
    %c0_i32 = arith.constant 0 : i32
    %c0_i32_0 = arith.constant 0 : i32
    %c0_i32_1 = arith.constant 0 : i32
    return %c0_i32, %c0_i32_0 : i32, i32
  }
  func.func @transform_5(%arg0: i32) -> (i32, i32) {
    %c0_i32 = arith.constant 0 : i32
    %c0_i32_0 = arith.constant 0 : i32
    return %arg0, %c0_i32 : i32, i32
  }
}

module attributes {stable_mosaic.version = 11 : i64} {
  func.func @_ae_kernel_resident(%arg0: i32, %arg1: memref<64x256xbf16, #tpu.memory_space<vmem>>, %arg2: memref<256x256xbf16, #tpu.memory_space<vmem>>, %arg3: memref<1x256xf32, #tpu.memory_space<vmem>>, %arg4: memref<256x256xbf16, #tpu.memory_space<vmem>>, %arg5: memref<1x256xf32, #tpu.memory_space<vmem>>, %arg6: memref<64x256xf32, #tpu.memory_space<vmem>>) attributes {dimension_semantics = [#tpu.dimension_semantics<parallel>], iteration_bounds = array<i64: 1>, scalar_prefetch = 0 : i64, scratch_operands = 0 : i64, tpu.core_type = #tpu.core_type<tc>, window_params = [{transform_indices = @transform_0, window_bounds = array<i64: 64, 256>}, {pipeline_mode = #tpu.pipeline_mode<synchronous>, transform_indices = @transform_1, window_bounds = array<i64: 256, 256>}, {pipeline_mode = #tpu.pipeline_mode<synchronous>, transform_indices = @transform_2, window_bounds = array<i64: 1, 256>}, {pipeline_mode = #tpu.pipeline_mode<synchronous>, transform_indices = @transform_3, window_bounds = array<i64: 256, 256>}, {pipeline_mode = #tpu.pipeline_mode<synchronous>, transform_indices = @transform_4, window_bounds = array<i64: 1, 256>}, {transform_indices = @transform_5, window_bounds = array<i64: 64, 256>}]} {
    %c0 = arith.constant 0 : index
    %c0_0 = arith.constant 0 : index
    %0 = vector.load %arg1[%c0, %c0_0] : memref<64x256xbf16, #tpu.memory_space<vmem>>, vector<64x256xbf16>
    %c0_1 = arith.constant 0 : index
    %c0_2 = arith.constant 0 : index
    %1 = vector.load %arg2[%c0_1, %c0_2] : memref<256x256xbf16, #tpu.memory_space<vmem>>, vector<256x256xbf16>
    %cst = arith.constant dense<0.000000e+00> : vector<64x256xf32>
    %2 = tpu.matmul %0, %1, %cst {dimension_numbers = #tpu.dot_dimension_numbers<[1], [0], [0], [1], [0, 0, 1, 1], [], []>} : vector<64x256xbf16>, vector<256x256xbf16>, vector<64x256xf32> -> vector<64x256xf32>
    %c0_3 = arith.constant 0 : index
    %c0_4 = arith.constant 0 : index
    %3 = vector.load %arg3[%c0_3, %c0_4] : memref<1x256xf32, #tpu.memory_space<vmem>>, vector<1x256xf32>
    %4 = vector.broadcast %3 : vector<1x256xf32> to vector<64x256xf32>
    %5 = arith.addf %2, %4 : vector<64x256xf32>
    %cst_5 = arith.constant 0.000000e+00 : f32
    %6 = vector.broadcast %cst_5 : f32 to vector<64x256xf32>
    %7 = arith.maximumf %5, %6 : vector<64x256xf32>
    %8 = arith.truncf %7 : vector<64x256xf32> to vector<64x256xbf16>
    %c0_6 = arith.constant 0 : index
    %c0_7 = arith.constant 0 : index
    %9 = vector.load %arg4[%c0_6, %c0_7] : memref<256x256xbf16, #tpu.memory_space<vmem>>, vector<256x256xbf16>
    %cst_8 = arith.constant dense<0.000000e+00> : vector<64x256xf32>
    %10 = tpu.matmul %8, %9, %cst_8 {dimension_numbers = #tpu.dot_dimension_numbers<[1], [0], [0], [1], [0, 0, 1, 1], [], []>} : vector<64x256xbf16>, vector<256x256xbf16>, vector<64x256xf32> -> vector<64x256xf32>
    %c0_9 = arith.constant 0 : index
    %c0_10 = arith.constant 0 : index
    %11 = vector.load %arg5[%c0_9, %c0_10] : memref<1x256xf32, #tpu.memory_space<vmem>>, vector<1x256xf32>
    %12 = vector.broadcast %11 : vector<1x256xf32> to vector<64x256xf32>
    %13 = arith.addf %10, %12 : vector<64x256xf32>
    %c0_11 = arith.constant 0 : index
    %c0_12 = arith.constant 0 : index
    %14 = vector.load %arg6[%c0_11, %c0_12] : memref<64x256xf32, #tpu.memory_space<vmem>>, vector<64x256xf32>
    tpu.vector_store %arg6[%c0_11, %c0_12], %13 {strides = array<i32>} : memref<64x256xf32, #tpu.memory_space<vmem>>, vector<64x256xf32>,
    return
  }
  func.func @transform_0(%arg0: i32) -> (i32, i32) {
    %c0_i32 = arith.constant 0 : i32
    %c0_i32_0 = arith.constant 0 : i32
    return %arg0, %c0_i32 : i32, i32
  }
  func.func @transform_1(%arg0: i32) -> (i32, i32) {
    %c0_i32 = arith.constant 0 : i32
    %c0_i32_0 = arith.constant 0 : i32
    %c0_i32_1 = arith.constant 0 : i32
    return %c0_i32, %c0_i32_0 : i32, i32
  }
  func.func @transform_2(%arg0: i32) -> (i32, i32) {
    %c0_i32 = arith.constant 0 : i32
    %c0_i32_0 = arith.constant 0 : i32
    %c0_i32_1 = arith.constant 0 : i32
    return %c0_i32, %c0_i32_0 : i32, i32
  }
  func.func @transform_3(%arg0: i32) -> (i32, i32) {
    %c0_i32 = arith.constant 0 : i32
    %c0_i32_0 = arith.constant 0 : i32
    %c0_i32_1 = arith.constant 0 : i32
    return %c0_i32, %c0_i32_0 : i32, i32
  }
  func.func @transform_4(%arg0: i32) -> (i32, i32) {
    %c0_i32 = arith.constant 0 : i32
    %c0_i32_0 = arith.constant 0 : i32
    %c0_i32_1 = arith.constant 0 : i32
    return %c0_i32, %c0_i32_0 : i32, i32
  }
  func.func @transform_5(%arg0: i32) -> (i32, i32) {
    %c0_i32 = arith.constant 0 : i32
    %c0_i32_0 = arith.constant 0 : i32
    return %arg0, %c0_i32 : i32, i32
  }
}

</mosaic_0001>

<llo_original>
// kernel: tpu_custom_call.1
$region0: #{tpu_custom_call.1}
  #allocation0 [shape = 'u32[]', space=smem, size = 0x4, offset = 0x4, fixed_abs, tag = 'smem constant byte address 0x4 - core index']
  #allocation1 [shape = 'u32[144,128]{1,0:T(1,128)}', space=vmem, size = 0x12000, scoped, tag = 'internal scratch']
  %s0 = inlined_call_operand.hbm [shape: bf16[64,256], index: 0, kind: input, shape index: {}]
  %s1 = inlined_call_operand.hbm [shape: bf16[256,256], index: 1, kind: input, shape index: {}]
  %s2 = inlined_call_operand.vmem [shape: f32[1,256], index: 2, kind: input, shape index: {}]
  %s3 = inlined_call_operand.hbm [shape: bf16[256,256], index: 3, kind: input, shape index: {}]
  %s4 = inlined_call_operand.vmem [shape: f32[1,256], index: 4, kind: input, shape index: {}]
  %s5 = inlined_call_operand.hbm [shape: f32[64,256], index: 5, kind: output, shape index: {}]
  %s6 = sld [smem:[#allocation0]]
  $region42: #{tpu_custom_call.1} parent=0
    _
  %s8 = ssub.s32 1, %s6
  %s9 = scalar_select 0, %s8, %s6
  $region1: #{tpu_custom_call.1} parent=0
    #allocation2 [shape = 'u8[32768]{0}', space=vmem, size = 0x8000, scoped, tag = 'input window, operand 0, single buffered']
    #allocation3 [shape = 's32[1]{0}', space=sflag, size = 0x4, scoped, tag = 'scoped memory for tpu_custom_call.1']
    #allocation4 [shape = 's32[1]{0}', space=sflag, size = 0x4, scoped, tag = 'scoped memory for tpu_custom_call.1']
    #allocation5 [shape = 'u8[131072]{0}', space=vmem, size = 0x20000, scoped, tag = 'input window, operand 1, single buffered']
    #allocation6 [shape = 's32[1]{0}', space=sflag, size = 0x4, scoped, tag = 'scoped memory for tpu_custom_call.1']
    #allocation7 [shape = 'u8[131072]{0}', space=vmem, size = 0x20000, scoped, tag = 'input window, operand 3, single buffered']
    #allocation8 [shape = 'u8[65536]{0}', space=vmem, size = 0x10000, scoped, tag = 'output window, operand 0, single buffered']
    %10 = vsyncpa [#allocation3], 0
    %11 = vsyncpa [#allocation6], 0
    %12 = vsyncpa [#allocation4], 0
    // Predicated region
    $region2: #{tpu_custom_call.1} parent=1 // pred_check
      _
    $region3: #{tpu_custom_call.1} parent=1 // pred_check_branch
      %14 = sbr.rel (0) target = $region5
    $region4: #{tpu_custom_call.1} parent=1 // pred_region
      %s16 = ssub.s32 1024, 1024
      %17 = vsyncadd [#allocation3], %s16
      %s18 = sshll.u32 [#allocation2], 4
      %s19 = int_to_ptr.vmem [resolvable:$true] %s18
      %24 = dma.hbm_to_vmem [thread:$0]  %s0, 1024, %s19, [#allocation3], 128, 128, 8
    $region5: #{tpu_custom_call.1} parent=1 // pred_fallthru
      _
    // Predicated region
    $region6: #{tpu_custom_call.1} parent=1 // pred_check
      _
    $region7: #{tpu_custom_call.1} parent=1 // pred_check_branch
      %26 = sbr.rel (0) target = $region9
    $region8: #{tpu_custom_call.1} parent=1 // pred_region
      %s28 = ssub.s32 4096, 4096
      %29 = vsyncadd [#allocation6], %s28
      %s30 = sshll.u32 [#allocation5], 4
      %s31 = int_to_ptr.vmem [resolvable:$true] %s30
      %36 = dma.hbm_to_vmem [thread:$0]  %s1, 4096, %s31, [#allocation6], 128, 128, 8
    $region9: #{tpu_custom_call.1} parent=1 // pred_fallthru
      _
    // Predicated region
    $region10: #{tpu_custom_call.1} parent=1 // pred_check
      _
    $region11: #{tpu_custom_call.1} parent=1 // pred_check_branch
      %38 = sbr.rel (0) target = $region13
    $region12: #{tpu_custom_call.1} parent=1 // pred_region
      _
    $region13: #{tpu_custom_call.1} parent=1 // pred_fallthru
      _
    // Predicated region
    $region14: #{tpu_custom_call.1} parent=1 // pred_check
      _
    $region15: #{tpu_custom_call.1} parent=1 // pred_check_branch
      %40 = sbr.rel (0) target = $region17
    $region16: #{tpu_custom_call.1} parent=1 // pred_region
      %s42 = ssub.s32 4096, 4096
      %43 = vsyncadd [#allocation6], %s42
      %s44 = sshll.u32 [#allocation7], 4
      %s45 = int_to_ptr.vmem [resolvable:$true] %s44
      %50 = dma.hbm_to_vmem [thread:$0]  %s3, 4096, %s45, [#allocation6], 128, 128, 8
    $region17: #{tpu_custom_call.1} parent=1 // pred_fallthru
      _
    // Predicated region
    $region18: #{tpu_custom_call.1} parent=1 // pred_check
      _
    $region19: #{tpu_custom_call.1} parent=1 // pred_check_branch
      %52 = sbr.rel (0) target = $region21
    $region20: #{tpu_custom_call.1} parent=1 // pred_region
      _
    $region21: #{tpu_custom_call.1} parent=1 // pred_fallthru
      _
    // Predicated region
    $region22: #{tpu_custom_call.1} parent=1 // pred_check
      _
    $region23: #{tpu_custom_call.1} parent=1 // pred_check_branch
      %54 = sbr.rel (0) target = $region25
    $region24: #{tpu_custom_call.1} parent=1 // pred_region
      %55 = dma.done [#allocation3], 1024
    $region25: #{tpu_custom_call.1} parent=1 // pred_fallthru
      _
    // Predicated region
    $region26: #{tpu_custom_call.1} parent=1 // pred_check
      _
    $region27: #{tpu_custom_call.1} parent=1 // pred_check_branch
      %57 = sbr.rel (0) target = $region29
    $region28: #{tpu_custom_call.1} parent=1 // pred_region
      %58 = dma.done [#allocation6], 4096
    $region29: #{tpu_custom_call.1} parent=1 // pred_fallthru
      _
    // Predicated region
    $region30: #{tpu_custom_call.1} parent=1 // pred_check
      _
    $region31: #{tpu_custom_call.1} parent=1 // pred_check_branch
      %60 = sbr.rel (0) target = $region33
    $region32: #{tpu_custom_call.1} parent=1 // pred_region
      %61 = dma.done [#allocation6], 4096
    $region33: #{tpu_custom_call.1} parent=1 // pred_fallthru
      _
    %v62 = vld [vmem:[#allocation2] sm:$0xff]
    %v63 = vld [vmem:[#allocation2 + $0x8] sm:$0xff]
    %v64 = vld [vmem:[#allocation2 + $0x10] sm:$0xff]
    %v65 = vld [vmem:[#allocation2 + $0x18] sm:$0xff]
    %v66 = vld [vmem:[#allocation2 + $0x20] sm:$0xff]
    %v67 = vld [vmem:[#allocation2 + $0x28] sm:$0xff]
    %v68 = vld [vmem:[#allocation2 + $0x30] sm:$0xff]
    %v69 = vld [vmem:[#allocation2 + $0x38] sm:$0xff]
    %v70 = vld [vmem:[#allocation5] sm:$0xff]
    %v71 = vld [vmem:[#allocation5 + $0x8] sm:$0xff]
    %v72 = vld [vmem:[#allocation5 + $0x10] sm:$0xff]
    %v73 = vld [vmem:[#allocation5 + $0x18] sm:$0xff]
    %v74 = vld [vmem:[#allocation5 + $0x20] sm:$0xff]
    %v75 = vld [vmem:[#allocation5 + $0x28] sm:$0xff]
    %v76 = vld [vmem:[#allocation5 + $0x30] sm:$0xff]
    %v77 = vld [vmem:[#allocation5 + $0x38] sm:$0xff]
    %v78 = vld [vmem:[#allocation5 + $0x40] sm:$0xff]
    %v79 = vld [vmem:[#allocation5 + $0x48] sm:$0xff]
    %v80 = vld [vmem:[#allocation5 + $0x50] sm:$0xff]
    %v81 = vld [vmem:[#allocation5 + $0x58] sm:$0xff]
    %v82 = vld [vmem:[#allocation5 + $0x60] sm:$0xff]
    %v83 = vld [vmem:[#allocation5 + $0x68] sm:$0xff]
    %v84 = vld [vmem:[#allocation5 + $0x70] sm:$0xff]
    %v85 = vld [vmem:[#allocation5 + $0x78] sm:$0xff]
    %v86 = vld [vmem:[#allocation5 + $0x80] sm:$0xff]
    %v87 = vld [vmem:[#allocation5 + $0x88] sm:$0xff]
    %v88 = vld [vmem:[#allocation5 + $0x90] sm:$0xff]
    %v89 = vld [vmem:[#allocation5 + $0x98] sm:$0xff]
    %v90 = vld [vmem:[#allocation5 + $0xa0] sm:$0xff]
    %v91 = vld [vmem:[#allocation5 + $0xa8] sm:$0xff]
    %v92 = vld [vmem:[#allocation5 + $0xb0] sm:$0xff]
    %v93 = vld [vmem:[#allocation5 + $0xb8] sm:$0xff]
    %v94 = vld [vmem:[#allocation5 + $0xc0] sm:$0xff]
    %v95 = vld [vmem:[#allocation5 + $0xc8] sm:$0xff]
    %v96 = vld [vmem:[#allocation5 + $0xd0] sm:$0xff]
    %v97 = vld [vmem:[#allocation5 + $0xd8] sm:$0xff]
    %v98 = vld [vmem:[#allocation5 + $0xe0] sm:$0xff]
    %v99 = vld [vmem:[#allocation5 + $0xe8] sm:$0xff]
    %v100 = vld [vmem:[#allocation5 + $0xf0] sm:$0xff]
    %v101 = vld [vmem:[#allocation5 + $0xf8] sm:$0xff]
    %v102 = vld [vmem:[%s2] sm:$0x3]
    %v104 = vlaneseq
    %v105 = vshrl.u32 %v104, 7
    %v106 = vsub.s32 0, %v105
    %v107 = vrot.slane %v102, %v106
    %v108 = vlaneseq
    %v109 = vshrl.u32 %v108, 7
    %v110 = vsub.s32 1, %v109
    %v111 = vrot.slane %v102, %v110
    %v122 = vunpack.c.l.b16 %v62
    %v123 = vunpack.c.h.b16 %v62
    %v124 = vunpack.c.l.b16 %v63
    %v125 = vunpack.c.h.b16 %v63
    %v126 = vunpack.c.l.b16 %v64
    %v127 = vunpack.c.h.b16 %v64
    %v128 = vunpack.c.l.b16 %v65
    %v129 = vunpack.c.h.b16 %v65
    %v130 = vunpack.c.l.b16 %v66
    %v131 = vunpack.c.h.b16 %v66
    %v132 = vunpack.c.l.b16 %v67
    %v133 = vunpack.c.h.b16 %v67
    %v134 = vunpack.c.l.b16 %v68
    %v135 = vunpack.c.h.b16 %v68
    %v136 = vunpack.c.l.b16 %v69
    %v137 = vunpack.c.h.b16 %v69
    %v138 = vpack.c.b16 %v124, %v122
    %v139 = vpack.c.b16 %v125, %v123
    %v140 = vpack.c.b16 %v128, %v126
    %v141 = vpack.c.b16 %v129, %v127
    %v142 = vpack.c.b16 %v132, %v130
    %v143 = vpack.c.b16 %v133, %v131
    %v144 = vpack.c.b16 %v136, %v134
    %v145 = vpack.c.b16 %v137, %v135
    %v186 = vunpack.c.l.b16 %v70
    %v187 = vunpack.c.h.b16 %v70
    %v188 = vunpack.c.l.b16 %v71
    %v189 = vunpack.c.h.b16 %v71
    %v190 = vunpack.c.l.b16 %v72
    %v191 = vunpack.c.h.b16 %v72
    %v192 = vunpack.c.l.b16 %v73
    %v193 = vunpack.c.h.b16 %v73
    %v194 = vunpack.c.l.b16 %v74
    %v195 = vunpack.c.h.b16 %v74
    %v196 = vunpack.c.l.b16 %v75
    %v197 = vunpack.c.h.b16 %v75
    %v198 = vunpack.c.l.b16 %v76
    %v199 = vunpack.c.h.b16 %v76
    %v200 = vunpack.c.l.b16 %v77
    %v201 = vunpack.c.h.b16 %v77
    %v202 = vunpack.c.l.b16 %v78
    %v203 = vunpack.c.h.b16 %v78
    %v204 = vunpack.c.l.b16 %v79
    %v205 = vunpack.c.h.b16 %v79
    %v206 = vunpack.c.l.b16 %v80
    %v207 = vunpack.c.h.b16 %v80
    %v208 = vunpack.c.l.b16 %v81
    %v209 = vunpack.c.h.b16 %v81
    %v210 = vunpack.c.l.b16 %v82
    %v211 = vunpack.c.h.b16 %v82
    %v212 = vunpack.c.l.b16 %v83
    %v213 = vunpack.c.h.b16 %v83
    %v214 = vunpack.c.l.b16 %v84
    %v215 = vunpack.c.h.b16 %v84
    %v216 = vunpack.c.l.b16 %v85
    %v217 = vunpack.c.h.b16 %v85
    %v218 = vunpack.c.l.b16 %v86
    %v219 = vunpack.c.h.b16 %v86
    %v220 = vunpack.c.l.b16 %v87
    %v221 = vunpack.c.h.b16 %v87
    %v222 = vunpack.c.l.b16 %v88
    %v223 = vunpack.c.h.b16 %v88
    %v224 = vunpack.c.l.b16 %v89
    %v225 = vunpack.c.h.b16 %v89
    %v226 = vunpack.c.l.b16 %v90
    %v227 = vunpack.c.h.b16 %v90
    %v228 = vunpack.c.l.b16 %v91
    %v229 = vunpack.c.h.b16 %v91
    %v230 = vunpack.c.l.b16 %v92
    %v231 = vunpack.c.h.b16 %v92
    %v232 = vunpack.c.l.b16 %v93
    %v233 = vunpack.c.h.b16 %v93
    %v234 = vunpack.c.l.b16 %v94
    %v235 = vunpack.c.h.b16 %v94
    %v236 = vunpack.c.l.b16 %v95
    %v237 = vunpack.c.h.b16 %v95
    %v238 = vunpack.c.l.b16 %v96
    %v239 = vunpack.c.h.b16 %v96
    %v240 = vunpack.c.l.b16 %v97
    %v241 = vunpack.c.h.b16 %v97
    %v242 = vunpack.c.l.b16 %v98
    %v243 = vunpack.c.h.b16 %v98
    %v244 = vunpack.c.l.b16 %v99
    %v245 = vunpack.c.h.b16 %v99
    %v246 = vunpack.c.l.b16 %v100
    %v247 = vunpack.c.h.b16 %v100
    %v248 = vunpack.c.l.b16 %v101
    %v249 = vunpack.c.h.b16 %v101
    %v250 = vpack.c.b16 %v188, %v186
    %v251 = vpack.c.b16 %v189, %v187
    %v252 = vpack.c.b16 %v192, %v190
    %v253 = vpack.c.b16 %v193, %v191
    %v254 = vpack.c.b16 %v196, %v194
    %v255 = vpack.c.b16 %v197, %v195
    %v256 = vpack.c.b16 %v200, %v198
    %v257 = vpack.c.b16 %v201, %v199
    %v258 = vpack.c.b16 %v204, %v202
    %v259 = vpack.c.b16 %v205, %v203
    %v260 = vpack.c.b16 %v208, %v206
    %v261 = vpack.c.b16 %v209, %v207
    %v262 = vpack.c.b16 %v212, %v210
    %v263 = vpack.c.b16 %v213, %v211
    %v264 = vpack.c.b16 %v216, %v214
    %v265 = vpack.c.b16 %v217, %v215
    %v266 = vpack.c.b16 %v220, %v218
    %v267 = vpack.c.b16 %v221, %v219
    %v268 = vpack.c.b16 %v224, %v222
    %v269 = vpack.c.b16 %v225, %v223
    %v270 = vpack.c.b16 %v228, %v226
    %v271 = vpack.c.b16 %v229, %v227
    %v272 = vpack.c.b16 %v232, %v230
    %v273 = vpack.c.b16 %v233, %v231
    %v274 = vpack.c.b16 %v236, %v234
    %v275 = vpack.c.b16 %v237, %v235
    %v276 = vpack.c.b16 %v240, %v238
    %v277 = vpack.c.b16 %v241, %v239
    %v278 = vpack.c.b16 %v244, %v242
    %v279 = vpack.c.b16 %v245, %v243
    %v280 = vpack.c.b16 %v248, %v246
    %v281 = vpack.c.b16 %v249, %v247
    %314 = vmatprep.subr.bf16.mxu0 %v251
    %315 = vmatpush1.bf16.msra.mxu0 %v250
    %316 = vmatprep.subr.bf16.mxu0 %v253
    %317 = vmatpush1.bf16.msra.mxu0 %v252
    %318 = vmatprep.subr.bf16.mxu0 %v255
    %319 = vmatpush1.bf16.msra.mxu0 %v254
    %320 = vmatprep.subr.bf16.mxu0 %v257
    %321 = vmatpush1.bf16.msra.mxu0 %v256
    %322 = vmatprep.subr.bf16.mxu0 %v259
    %323 = vmatpush1.bf16.msra.mxu0 %v258
    %324 = vmatprep.subr.bf16.mxu0 %v261
    %325 = vmatpush1.bf16.msra.mxu0 %v260
    %326 = vmatprep.subr.bf16.mxu0 %v263
    %327 = vmatpush1.bf16.msra.mxu0 %v262
    %328 = vmatprep.subr.bf16.mxu0 %v265
    %329 = vmatpush1.bf16.msra.mxu0 %v264
    %330 = vmatprep.subr.bf16.mxu0 %v267
    %331 = vmatpush1.bf16.msra.mxu0 %v266
    %332 = vmatprep.subr.bf16.mxu0 %v269
    %333 = vmatpush1.bf16.msra.mxu0 %v268
    %334 = vmatprep.subr.bf16.mxu0 %v271
    %335 = vmatpush1.bf16.msra.mxu0 %v270
    %336 = vmatprep.subr.bf16.mxu0 %v273
    %337 = vmatpush1.bf16.msra.mxu0 %v272
    %338 = vmatprep.subr.bf16.mxu0 %v275
    %339 = vmatpush1.bf16.msra.mxu0 %v274
    %340 = vmatprep.subr.bf16.mxu0 %v277
    %341 = vmatpush1.bf16.msra.mxu0 %v276
    %342 = vmatprep.subr.bf16.mxu0 %v279
    %343 = vmatpush1.bf16.msra.mxu0 %v278
    %344 = vmatprep.subr.bf16.mxu0 %v281
    %345 = vmatpush1.bf16.msra.mxu0 %v280
    %346 = vmatprep.mubr.bf16.mxu0 %v139
    %347 = vmatmul.mubr.bf16.gmra.mrb[0].mxu0 %v138
    %v348 = vpop.f32.mrb[0].mxu0
    %v349 = vadd.f32 %v107, %v348
    %v350 = vpop.f32.mrb[0].mxu0
    %v351 = vadd.f32 %v111, %v350
    %v352 = vpop.f32.mrb[0].mxu0
    %v353 = vadd.f32 %v107, %v352
    %v354 = vpop.f32.mrb[0].mxu0
    %v355 = vadd.f32 %v111, %v354
    %356 = vmatprep.mubr.bf16.mxu0 %v141
    %357 = vmatmul.mubr.bf16.gmra.mrb[0].mxu0 %v140
    %v358 = vpop.f32.mrb[0].mxu0
    %v359 = vadd.f32 %v107, %v358
    %v360 = vpop.f32.mrb[0].mxu0
    %v361 = vadd.f32 %v111, %v360
    %v362 = vpop.f32.mrb[0].mxu0
    %v363 = vadd.f32 %v107, %v362
    %v364 = vpop.f32.mrb[0].mxu0
    %v365 = vadd.f32 %v111, %v364
    %366 = vmatprep.mubr.bf16.mxu0 %v143
    %367 = vmatmul.mubr.bf16.gmra.mrb[0].mxu0 %v142
    %v368 = vpop.f32.mrb[0].mxu0
    %v369 = vadd.f32 %v107, %v368
    %v370 = vpop.f32.mrb[0].mxu0
    %v371 = vadd.f32 %v111, %v370
    %v372 = vpop.f32.mrb[0].mxu0
    %v373 = vadd.f32 %v107, %v372
    %v374 = vpop.f32.mrb[0].mxu0
    %v375 = vadd.f32 %v111, %v374
    %376 = vmatprep.mubr.bf16.mxu0 %v145
    %377 = vmatmul.mubr.bf16.gmra.mrb[0].mxu0 %v144
    %v378 = vpop.f32.mrb[0].mxu0
    %v379 = vadd.f32 %v107, %v378
    %v380 = vpop.f32.mrb[0].mxu0
    %v381 = vadd.f32 %v111, %v380
    %v382 = vpop.f32.mrb[0].mxu0
    %v383 = vadd.f32 %v107, %v382
    %v384 = vpop.f32.mrb[0].mxu0
    %v385 = vadd.f32 %v111, %v384
    %386 = vdwg.mxu0
    %v387 = vmax.f32 %v349, 0.0
    %v388 = vmax.f32 %v351, 0.0
    %v389 = vmax.f32 %v353, 0.0
    %v390 = vmax.f32 %v355, 0.0
    %v391 = vmax.f32 %v359, 0.0
    %v392 = vmax.f32 %v361, 0.0
    %v393 = vmax.f32 %v363, 0.0
    %v394 = vmax.f32 %v365, 0.0
    %v395 = vmax.f32 %v369, 0.0
    %v396 = vmax.f32 %v371, 0.0
    %v397 = vmax.f32 %v373, 0.0
    %v398 = vmax.f32 %v375, 0.0
    %v399 = vmax.f32 %v379, 0.0
    %v400 = vmax.f32 %v381, 0.0
    %v401 = vmax.f32 %v383, 0.0
    %v402 = vmax.f32 %v385, 0.0
    %v403 = vpack.c.bf16 %v389, %v387
    %v404 = vpack.c.bf16 %v390, %v388
    %v405 = vpack.c.bf16 %v393, %v391
    %v406 = vpack.c.bf16 %v394, %v392
    %v407 = vpack.c.bf16 %v397, %v395
    %v408 = vpack.c.bf16 %v398, %v396
    %v409 = vpack.c.bf16 %v401, %v399
    %v410 = vpack.c.bf16 %v402, %v400
    %v411 = vld [vmem:[#allocation7] sm:$0xff]
    %v412 = vld [vmem:[#allocation7 + $0x8] sm:$0xff]
    %v413 = vld [vmem:[#allocation7 + $0x10] sm:$0xff]
    %v414 = vld [vmem:[#allocation7 + $0x18] sm:$0xff]
    %v415 = vld [vmem:[#allocation7 + $0x20] sm:$0xff]
    %v416 = vld [vmem:[#allocation7 + $0x28] sm:$0xff]
    %v417 = vld [vmem:[#allocation7 + $0x30] sm:$0xff]
    %v418 = vld [vmem:[#allocation7 + $0x38] sm:$0xff]
    %v419 = vld [vmem:[#allocation7 + $0x40] sm:$0xff]
    %v420 = vld [vmem:[#allocation7 + $0x48] sm:$0xff]
    %v421 = vld [vmem:[#allocation7 + $0x50] sm:$0xff]
    %v422 = vld [vmem:[#allocation7 + $0x58] sm:$0xff]
    %v423 = vld [vmem:[#allocation7 + $0x60] sm:$0xff]
    %v424 = vld [vmem:[#allocation7 + $0x68] sm:$0xff]
    %v425 = vld [vmem:[#allocation7 + $0x70] sm:$0xff]
    %v426 = vld [vmem:[#allocation7 + $0x78] sm:$0xff]
    %v427 = vld [vmem:[#allocation7 + $0x80] sm:$0xff]
    %v428 = vld [vmem:[#allocation7 + $0x88] sm:$0xff]
    %v429 = vld [vmem:[#allocation7 + $0x90] sm:$0xff]
    %v430 = vld [vmem:[#allocation7 + $0x98] sm:$0xff]
    %v431 = vld [vmem:[#allocation7 + $0xa0] sm:$0xff]
    %v432 = vld [vmem:[#allocation7 + $0xa8] sm:$0xff]
    %v433 = vld [vmem:[#allocation7 + $0xb0] sm:$0xff]
    %v434 = vld [vmem:[#allocation7 + $0xb8] sm:$0xff]
    %v435 = vld [vmem:[#allocation7 + $0xc0] sm:$0xff]
    %v436 = vld [vmem:[#allocation7 + $0xc8] sm:$0xff]
    %v437 = vld [vmem:[#allocation7 + $0xd0] sm:$0xff]
    %v438 = vld [vmem:[#allocation7 + $0xd8] sm:$0xff]
    %v439 = vld [vmem:[#allocation7 + $0xe0] sm:$0xff]
    %v440 = vld [vmem:[#allocation7 + $0xe8] sm:$0xff]
    %v441 = vld [vmem:[#allocation7 + $0xf0] sm:$0xff]
    %v442 = vld [vmem:[#allocation7 + $0xf8] sm:$0xff]
    %v443 = vld [vmem:[%s4] sm:$0x3]
    %v445 = vlaneseq
    %v446 = vshrl.u32 %v445, 7
    %v447 = vsub.s32 0, %v446
    %v448 = vrot.slane %v443, %v447
    %v449 = vlaneseq
    %v450 = vshrl.u32 %v449, 7
    %v451 = vsub.s32 1, %v450
    %v452 = vrot.slane %v443, %v451
    %v487 = vunpack.c.l.b16 %v411
    %v488 = vunpack.c.h.b16 %v411
    %v489 = vunpack.c.l.b16 %v412
    %v490 = vunpack.c.h.b16 %v412
    %v491 = vunpack.c.l.b16 %v413
    %v492 = vunpack.c.h.b16 %v413
    %v493 = vunpack.c.l.b16 %v414
    %v494 = vunpack.c.h.b16 %v414
    %v495 = vunpack.c.l.b16 %v415
    %v496 = vunpack.c.h.b16 %v415
    %v497 = vunpack.c.l.b16 %v416
    %v498 = vunpack.c.h.b16 %v416
    %v499 = vunpack.c.l.b16 %v417
    %v500 = vunpack.c.h.b16 %v417
    %v501 = vunpack.c.l.b16 %v418
    %v502 = vunpack.c.h.b16 %v418
    %v503 = vunpack.c.l.b16 %v419
    %v504 = vunpack.c.h.b16 %v419
    %v505 = vunpack.c.l.b16 %v420
    %v506 = vunpack.c.h.b16 %v420
    %v507 = vunpack.c.l.b16 %v421
    %v508 = vunpack.c.h.b16 %v421
    %v509 = vunpack.c.l.b16 %v422
    %v510 = vunpack.c.h.b16 %v422
    %v511 = vunpack.c.l.b16 %v423
    %v512 = vunpack.c.h.b16 %v423
    %v513 = vunpack.c.l.b16 %v424
    %v514 = vunpack.c.h.b16 %v424
    %v515 = vunpack.c.l.b16 %v425
    %v516 = vunpack.c.h.b16 %v425
    %v517 = vunpack.c.l.b16 %v426
    %v518 = vunpack.c.h.b16 %v426
    %v519 = vunpack.c.l.b16 %v427
    %v520 = vunpack.c.h.b16 %v427
    %v521 = vunpack.c.l.b16 %v428
    %v522 = vunpack.c.h.b16 %v428
    %v523 = vunpack.c.l.b16 %v429
    %v524 = vunpack.c.h.b16 %v429
    %v525 = vunpack.c.l.b16 %v430
    %v526 = vunpack.c.h.b16 %v430
    %v527 = vunpack.c.l.b16 %v431
    %v528 = vunpack.c.h.b16 %v431
    %v529 = vunpack.c.l.b16 %v432
    %v530 = vunpack.c.h.b16 %v432
    %v531 = vunpack.c.l.b16 %v433
    %v532 = vunpack.c.h.b16 %v433
    %v533 = vunpack.c.l.b16 %v434
    %v534 = vunpack.c.h.b16 %v434
    %v535 = vunpack.c.l.b16 %v435
    %v536 = vunpack.c.h.b16 %v435
    %v537 = vunpack.c.l.b16 %v436
    %v538 = vunpack.c.h.b16 %v436
    %v539 = vunpack.c.l.b16 %v437
    %v540 = vunpack.c.h.b16 %v437
    %v541 = vunpack.c.l.b16 %v438
    %v542 = vunpack.c.h.b16 %v438
    %v543 = vunpack.c.l.b16 %v439
    %v544 = vunpack.c.h.b16 %v439
    %v545 = vunpack.c.l.b16 %v440
    %v546 = vunpack.c.h.b16 %v440
    %v547 = vunpack.c.l.b16 %v441
    %v548 = vunpack.c.h.b16 %v441
    %v549 = vunpack.c.l.b16 %v442
    %v550 = vunpack.c.h.b16 %v442
    %v551 = vpack.c.b16 %v489, %v487
    %v552 = vpack.c.b16 %v490, %v488
    %v553 = vpack.c.b16 %v493, %v491
    %v554 = vpack.c.b16 %v494, %v492
    %v555 = vpack.c.b16 %v497, %v495
    %v556 = vpack.c.b16 %v498, %v496
    %v557 = vpack.c.b16 %v501, %v499
    %v558 = vpack.c.b16 %v502, %v500
    %v559 = vpack.c.b16 %v505, %v503
    %v560 = vpack.c.b16 %v506, %v504
    %v561 = vpack.c.b16 %v509, %v507
    %v562 = vpack.c.b16 %v510, %v508
    %v563 = vpack.c.b16 %v513, %v511
    %v564 = vpack.c.b16 %v514, %v512
    %v565 = vpack.c.b16 %v517, %v515
    %v566 = vpack.c.b16 %v518, %v516
    %v567 = vpack.c.b16 %v521, %v519
    %v568 = vpack.c.b16 %v522, %v520
    %v569 = vpack.c.b16 %v525, %v523
    %v570 = vpack.c.b16 %v526, %v524
    %v571 = vpack.c.b16 %v529, %v527
    %v572 = vpack.c.b16 %v530, %v528
    %v573 = vpack.c.b16 %v533, %v531
    %v574 = vpack.c.b16 %v534, %v532
    %v575 = vpack.c.b16 %v537, %v535
    %v576 = vpack.c.b16 %v538, %v536
    %v577 = vpack.c.b16 %v541, %v539
    %v578 = vpack.c.b16 %v542, %v540
    %v579 = vpack.c.b16 %v545, %v543
    %v580 = vpack.c.b16 %v546, %v544
    %v581 = vpack.c.b16 %v549, %v547
    %v582 = vpack.c.b16 %v550, %v548
    %615 = vmatprep.subr.bf16.mxu0 %v552
    %616 = vmatpush1.bf16.msra.mxu0 %v551
    %617 = vmatprep.subr.bf16.mxu0 %v554
    %618 = vmatpush1.bf16.msra.mxu0 %v553
    %619 = vmatprep.subr.bf16.mxu0 %v556
    %620 = vmatpush1.bf16.msra.mxu0 %v555
    %621 = vmatprep.subr.bf16.mxu0 %v558
    %622 = vmatpush1.bf16.msra.mxu0 %v557
    %623 = vmatprep.subr.bf16.mxu0 %v560
    %624 = vmatpush1.bf16.msra.mxu0 %v559
    %625 = vmatprep.subr.bf16.mxu0 %v562
    %626 = vmatpush1.bf16.msra.mxu0 %v561
    %627 = vmatprep.subr.bf16.mxu0 %v564
    %628 = vmatpush1.bf16.msra.mxu0 %v563
    %629 = vmatprep.subr.bf16.mxu0 %v566
    %630 = vmatpush1.bf16.msra.mxu0 %v565
    %631 = vmatprep.subr.bf16.mxu0 %v568
    %632 = vmatpush1.bf16.msra.mxu0 %v567
    %633 = vmatprep.subr.bf16.mxu0 %v570
    %634 = vmatpush1.bf16.msra.mxu0 %v569
    %635 = vmatprep.subr.bf16.mxu0 %v572
    %636 = vmatpush1.bf16.msra.mxu0 %v571
    %637 = vmatprep.subr.bf16.mxu0 %v574
    %638 = vmatpush1.bf16.msra.mxu0 %v573
    %639 = vmatprep.subr.bf16.mxu0 %v576
    %640 = vmatpush1.bf16.msra.mxu0 %v575
    %641 = vmatprep.subr.bf16.mxu0 %v578
    %642 = vmatpush1.bf16.msra.mxu0 %v577
    %643 = vmatprep.subr.bf16.mxu0 %v580
    %644 = vmatpush1.bf16.msra.mxu0 %v579
    %645 = vmatprep.subr.bf16.mxu0 %v582
    %646 = vmatpush1.bf16.msra.mxu0 %v581
    %647 = vmatprep.mubr.bf16.mxu0 %v404
    %648 = vmatmul.mubr.bf16.gmra.mrb[0].mxu0 %v403
    %v649 = vpop.f32.mrb[0].mxu0
    %v650 = vadd.f32 %v448, %v649
    %v651 = vpop.f32.mrb[0].mxu0
    %v652 = vadd.f32 %v452, %v651
    %v653 = vpop.f32.mrb[0].mxu0
    %v654 = vadd.f32 %v448, %v653
    %v655 = vpop.f32.mrb[0].mxu0
    %v656 = vadd.f32 %v452, %v655
    %657 = vmatprep.mubr.bf16.mxu0 %v406
    %658 = vmatmul.mubr.bf16.gmra.mrb[0].mxu0 %v405
    %v659 = vpop.f32.mrb[0].mxu0
    %v660 = vadd.f32 %v448, %v659
    %v661 = vpop.f32.mrb[0].mxu0
    %v662 = vadd.f32 %v452, %v661
    %v663 = vpop.f32.mrb[0].mxu0
    %v664 = vadd.f32 %v448, %v663
    %v665 = vpop.f32.mrb[0].mxu0
    %v666 = vadd.f32 %v452, %v665
    %667 = vmatprep.mubr.bf16.mxu0 %v408
    %668 = vmatmul.mubr.bf16.gmra.mrb[0].mxu0 %v407
    %v669 = vpop.f32.mrb[0].mxu0
    %v670 = vadd.f32 %v448, %v669
    %v671 = vpop.f32.mrb[0].mxu0
    %v672 = vadd.f32 %v452, %v671
    %v673 = vpop.f32.mrb[0].mxu0
    %v674 = vadd.f32 %v448, %v673
    %v675 = vpop.f32.mrb[0].mxu0
    %v676 = vadd.f32 %v452, %v675
    %677 = vmatprep.mubr.bf16.mxu0 %v410
    %678 = vmatmul.mubr.bf16.gmra.mrb[0].mxu0 %v409
    %v679 = vpop.f32.mrb[0].mxu0
    %v680 = vadd.f32 %v448, %v679
    %v681 = vpop.f32.mrb[0].mxu0
    %v682 = vadd.f32 %v452, %v681
    %v683 = vpop.f32.mrb[0].mxu0
    %v684 = vadd.f32 %v448, %v683
    %v685 = vpop.f32.mrb[0].mxu0
    %v686 = vadd.f32 %v452, %v685
    %687 = vdwg.mxu0
    %688 = vst [vmem:[#allocation8] sm:$0xff] %v650
    %689 = vst [vmem:[#allocation8 + $0x8] sm:$0xff] %v652
    %690 = vst [vmem:[#allocation8 + $0x10] sm:$0xff] %v654
    %691 = vst [vmem:[#allocation8 + $0x18] sm:$0xff] %v656
    %692 = vst [vmem:[#allocation8 + $0x20] sm:$0xff] %v660
    %693 = vst [vmem:[#allocation8 + $0x28] sm:$0xff] %v662
    %694 = vst [vmem:[#allocation8 + $0x30] sm:$0xff] %v664
    %695 = vst [vmem:[#allocation8 + $0x38] sm:$0xff] %v666
    %696 = vst [vmem:[#allocation8 + $0x40] sm:$0xff] %v670
    %697 = vst [vmem:[#allocation8 + $0x48] sm:$0xff] %v672
    %698 = vst [vmem:[#allocation8 + $0x50] sm:$0xff] %v674
    %699 = vst [vmem:[#allocation8 + $0x58] sm:$0xff] %v676
    %700 = vst [vmem:[#allocation8 + $0x60] sm:$0xff] %v680
    %701 = vst [vmem:[#allocation8 + $0x68] sm:$0xff] %v682
    %702 = vst [vmem:[#allocation8 + $0x70] sm:$0xff] %v684
    %703 = vst [vmem:[#allocation8 + $0x78] sm:$0xff] %v686
    // Predicated region
    $region34: #{tpu_custom_call.1} parent=1 // pred_check
      _
    $region35: #{tpu_custom_call.1} parent=1 // pred_check_branch
      %705 = sbr.rel (0) target = $region37
    $region36: #{tpu_custom_call.1} parent=1 // pred_region
      %s707 = ssub.s32 2048, 2048
      %708 = vsyncadd [#allocation4], %s707
      %s709 = sshll.u32 [#allocation8], 4
      %s710 = int_to_ptr.vmem [resolvable:$true] %s709
      %715 = dma.vmem_to_hbm [thread:$0]  %s710, 2048, %s5, [#allocation4], 256, 256, 16
    $region37: #{tpu_custom_call.1} parent=1 // pred_fallthru
      _
    // Predicated region
    $region38: #{tpu_custom_call.1} parent=1 // pred_check
      _
    $region39: #{tpu_custom_call.1} parent=1 // pred_check_branch
      %717 = sbr.rel (0) target = $region41
    $region40: #{tpu_custom_call.1} parent=1 // pred_region
      %718 = dma.done [#allocation4], 2048
    $region41: #{tpu_custom_call.1} parent=1 // pred_fallthru
      _
    %719 = vsyncpa [#allocation3], 1
    %720 = vsyncpa [#allocation6], 1
    %721 = vsyncpa [#allocation4], 1

// kernel: tpu_custom_call.1
$region0: #{tpu_custom_call.1}
  #allocation0 [shape = 'u32[]', space=smem, size = 0x4, offset = 0x4, fixed_abs, tag = 'smem constant byte address 0x4 - core index']
  #allocation1 [shape = 'u32[144,128]{1,0:T(1,128)}', space=vmem, size = 0x12000, scoped, tag = 'internal scratch']
  %s0 = inlined_call_operand.hbm [shape: bf16[64,256], index: 0, kind: input, shape index: {}]
  %s1 = inlined_call_operand.hbm [shape: bf16[256,256], index: 1, kind: input, shape index: {}]
  %s2 = inlined_call_operand.vmem [shape: f32[1,256], index: 2, kind: input, shape index: {}]
  %s3 = inlined_call_operand.hbm [shape: bf16[256,256], index: 3, kind: input, shape index: {}]
  %s4 = inlined_call_operand.vmem [shape: f32[1,256], index: 4, kind: input, shape index: {}]
  %s5 = inlined_call_operand.hbm [shape: f32[64,256], index: 5, kind: output, shape index: {}]
  %s6 = sld [smem:[#allocation0]]
  $region42: #{tpu_custom_call.1} parent=0
    _
  %s8 = ssub.s32 1, %s6
  %s9 = scalar_select 0, %s8, %s6
  $region1: #{tpu_custom_call.1} parent=0
    #allocation2 [shape = 'u8[32768]{0}', space=vmem, size = 0x8000, scoped, tag = 'input window, operand 0, single buffered']
    #allocation3 [shape = 's32[1]{0}', space=sflag, size = 0x4, scoped, tag = 'scoped memory for tpu_custom_call.1']
    #allocation4 [shape = 's32[1]{0}', space=sflag, size = 0x4, scoped, tag = 'scoped memory for tpu_custom_call.1']
    #allocation5 [shape = 'u8[131072]{0}', space=vmem, size = 0x20000, scoped, tag = 'input window, operand 1, single buffered']
    #allocation6 [shape = 's32[1]{0}', space=sflag, size = 0x4, scoped, tag = 'scoped memory for tpu_custom_call.1']
    #allocation7 [shape = 'u8[131072]{0}', space=vmem, size = 0x20000, scoped, tag = 'input window, operand 3, single buffered']
    #allocation8 [shape = 'u8[65536]{0}', space=vmem, size = 0x10000, scoped, tag = 'output window, operand 0, single buffered']
    %10 = vsyncpa [#allocation3], 0
    %11 = vsyncpa [#allocation6], 0
    %12 = vsyncpa [#allocation4], 0
    // Predicated region
    $region2: #{tpu_custom_call.1} parent=1 // pred_check
      _
    $region3: #{tpu_custom_call.1} parent=1 // pred_check_branch
      %14 = sbr.rel (0) target = $region5
    $region4: #{tpu_custom_call.1} parent=1 // pred_region
      %s16 = ssub.s32 1024, 1024
      %17 = vsyncadd [#allocation3], %s16
      %s18 = sshll.u32 [#allocation2], 4
      %s19 = int_to_ptr.vmem [resolvable:$true] %s18
      %24 = dma.hbm_to_vmem [thread:$0]  %s0, 1024, %s19, [#allocation3], 128, 128, 8
    $region5: #{tpu_custom_call.1} parent=1 // pred_fallthru
      _
    // Predicated region
    $region6: #{tpu_custom_call.1} parent=1 // pred_check
      _
    $region7: #{tpu_custom_call.1} parent=1 // pred_check_branch
      %26 = sbr.rel (0) target = $region9
    $region8: #{tpu_custom_call.1} parent=1 // pred_region
      %s28 = ssub.s32 4096, 4096
      %29 = vsyncadd [#allocation6], %s28
      %s30 = sshll.u32 [#allocation5], 4
      %s31 = int_to_ptr.vmem [resolvable:$true] %s30
      %36 = dma.hbm_to_vmem [thread:$0]  %s1, 4096, %s31, [#allocation6], 128, 128, 8
    $region9: #{tpu_custom_call.1} parent=1 // pred_fallthru
      _
    // Predicated region
    $region10: #{tpu_custom_call.1} parent=1 // pred_check
      _
    $region11: #{tpu_custom_call.1} parent=1 // pred_check_branch
      %38 = sbr.rel (0) target = $region13
    $region12: #{tpu_custom_call.1} parent=1 // pred_region
      _
    $region13: #{tpu_custom_call.1} parent=1 // pred_fallthru
      _
    // Predicated region
    $region14: #{tpu_custom_call.1} parent=1 // pred_check
      _
    $region15: #{tpu_custom_call.1} parent=1 // pred_check_branch
      %40 = sbr.rel (0) target = $region17
    $region16: #{tpu_custom_call.1} parent=1 // pred_region
      %s42 = ssub.s32 4096, 4096
      %43 = vsyncadd [#allocation6], %s42
      %s44 = sshll.u32 [#allocation7], 4
      %s45 = int_to_ptr.vmem [resolvable:$true] %s44
      %50 = dma.hbm_to_vmem [thread:$0]  %s3, 4096, %s45, [#allocation6], 128, 128, 8
    $region17: #{tpu_custom_call.1} parent=1 // pred_fallthru
      _
    // Predicated region
    $region18: #{tpu_custom_call.1} parent=1 // pred_check
      _
    $region19: #{tpu_custom_call.1} parent=1 // pred_check_branch
      %52 = sbr.rel (0) target = $region21
    $region20: #{tpu_custom_call.1} parent=1 // pred_region
      _
    $region21: #{tpu_custom_call.1} parent=1 // pred_fallthru
      _
    // Predicated region
    $region22: #{tpu_custom_call.1} parent=1 // pred_check
      _
    $region23: #{tpu_custom_call.1} parent=1 // pred_check_branch
      %54 = sbr.rel (0) target = $region25
    $region24: #{tpu_custom_call.1} parent=1 // pred_region
      %55 = dma.done [#allocation3], 1024
    $region25: #{tpu_custom_call.1} parent=1 // pred_fallthru
      _
    // Predicated region
    $region26: #{tpu_custom_call.1} parent=1 // pred_check
      _
    $region27: #{tpu_custom_call.1} parent=1 // pred_check_branch
      %57 = sbr.rel (0) target = $region29
    $region28: #{tpu_custom_call.1} parent=1 // pred_region
      %58 = dma.done [#allocation6], 4096
    $region29: #{tpu_custom_call.1} parent=1 // pred_fallthru
      _
    // Predicated region
    $region30: #{tpu_custom_call.1} parent=1 // pred_check
      _
    $region31: #{tpu_custom_call.1} parent=1 // pred_check_branch
      %60 = sbr.rel (0) target = $region33
    $region32: #{tpu_custom_call.1} parent=1 // pred_region
      %61 = dma.done [#allocation6], 4096
    $region33: #{tpu_custom_call.1} parent=1 // pred_fallthru
      _
    %v62 = vld [vmem:[#allocation2] sm:$0xff]
    %v63 = vld [vmem:[#allocation2 + $0x8] sm:$0xff]
    %v64 = vld [vmem:[#allocation2 + $0x10] sm:$0xff]
    %v65 = vld [vmem:[#allocation2 + $0x18] sm:$0xff]
    %v66 = vld [vmem:[#allocation2 + $0x20] sm:$0xff]
    %v67 = vld [vmem:[#allocation2 + $0x28] sm:$0xff]
    %v68 = vld [vmem:[#allocation2 + $0x30] sm:$0xff]
    %v69 = vld [vmem:[#allocation2 + $0x38] sm:$0xff]
    %v70 = vld [vmem:[#allocation5] sm:$0xff]
    %v71 = vld [vmem:[#allocation5 + $0x8] sm:$0xff]
    %v72 = vld [vmem:[#allocation5 + $0x10] sm:$0xff]
    %v73 = vld [vmem:[#allocation5 + $0x18] sm:$0xff]
    %v74 = vld [vmem:[#allocation5 + $0x20] sm:$0xff]
    %v75 = vld [vmem:[#allocation5 + $0x28] sm:$0xff]
    %v76 = vld [vmem:[#allocation5 + $0x30] sm:$0xff]
    %v77 = vld [vmem:[#allocation5 + $0x38] sm:$0xff]
    %v78 = vld [vmem:[#allocation5 + $0x40] sm:$0xff]
    %v79 = vld [vmem:[#allocation5 + $0x48] sm:$0xff]
    %v80 = vld [vmem:[#allocation5 + $0x50] sm:$0xff]
    %v81 = vld [vmem:[#allocation5 + $0x58] sm:$0xff]
    %v82 = vld [vmem:[#allocation5 + $0x60] sm:$0xff]
    %v83 = vld [vmem:[#allocation5 + $0x68] sm:$0xff]
    %v84 = vld [vmem:[#allocation5 + $0x70] sm:$0xff]
    %v85 = vld [vmem:[#allocation5 + $0x78] sm:$0xff]
    %v86 = vld [vmem:[#allocation5 + $0x80] sm:$0xff]
    %v87 = vld [vmem:[#allocation5 + $0x88] sm:$0xff]
    %v88 = vld [vmem:[#allocation5 + $0x90] sm:$0xff]
    %v89 = vld [vmem:[#allocation5 + $0x98] sm:$0xff]
    %v90 = vld [vmem:[#allocation5 + $0xa0] sm:$0xff]
    %v91 = vld [vmem:[#allocation5 + $0xa8] sm:$0xff]
    %v92 = vld [vmem:[#allocation5 + $0xb0] sm:$0xff]
    %v93 = vld [vmem:[#allocation5 + $0xb8] sm:$0xff]
    %v94 = vld [vmem:[#allocation5 + $0xc0] sm:$0xff]
    %v95 = vld [vmem:[#allocation5 + $0xc8] sm:$0xff]
    %v96 = vld [vmem:[#allocation5 + $0xd0] sm:$0xff]
    %v97 = vld [vmem:[#allocation5 + $0xd8] sm:$0xff]
    %v98 = vld [vmem:[#allocation5 + $0xe0] sm:$0xff]
    %v99 = vld [vmem:[#allocation5 + $0xe8] sm:$0xff]
    %v100 = vld [vmem:[#allocation5 + $0xf0] sm:$0xff]
    %v101 = vld [vmem:[#allocation5 + $0xf8] sm:$0xff]
    %v102 = vld [vmem:[%s2] sm:$0x3]
    %v104 = vlaneseq
    %v105 = vshrl.u32 %v104, 7
    %v106 = vsub.s32 0, %v105
    %v107 = vrot.slane %v102, %v106
    %v108 = vlaneseq
    %v109 = vshrl.u32 %v108, 7
    %v110 = vsub.s32 1, %v109
    %v111 = vrot.slane %v102, %v110
    %v122 = vunpack.c.l.b16 %v62
    %v123 = vunpack.c.h.b16 %v62
    %v124 = vunpack.c.l.b16 %v63
    %v125 = vunpack.c.h.b16 %v63
    %v126 = vunpack.c.l.b16 %v64
    %v127 = vunpack.c.h.b16 %v64
    %v128 = vunpack.c.l.b16 %v65
    %v129 = vunpack.c.h.b16 %v65
    %v130 = vunpack.c.l.b16 %v66
    %v131 = vunpack.c.h.b16 %v66
    %v132 = vunpack.c.l.b16 %v67
    %v133 = vunpack.c.h.b16 %v67
    %v134 = vunpack.c.l.b16 %v68
    %v135 = vunpack.c.h.b16 %v68
    %v136 = vunpack.c.l.b16 %v69
    %v137 = vunpack.c.h.b16 %v69
    %v138 = vpack.c.b16 %v124, %v122
    %v139 = vpack.c.b16 %v125, %v123
    %v140 = vpack.c.b16 %v128, %v126
    %v141 = vpack.c.b16 %v129, %v127
    %v142 = vpack.c.b16 %v132, %v130
    %v143 = vpack.c.b16 %v133, %v131
    %v144 = vpack.c.b16 %v136, %v134
    %v145 = vpack.c.b16 %v137, %v135
    %v186 = vunpack.c.l.b16 %v70
    %v187 = vunpack.c.h.b16 %v70
    %v188 = vunpack.c.l.b16 %v71
    %v189 = vunpack.c.h.b16 %v71
    %v190 = vunpack.c.l.b16 %v72
    %v191 = vunpack.c.h.b16 %v72
    %v192 = vunpack.c.l.b16 %v73
    %v193 = vunpack.c.h.b16 %v73
    %v194 = vunpack.c.l.b16 %v74
    %v195 = vunpack.c.h.b16 %v74
    %v196 = vunpack.c.l.b16 %v75
    %v197 = vunpack.c.h.b16 %v75
    %v198 = vunpack.c.l.b16 %v76
    %v199 = vunpack.c.h.b16 %v76
    %v200 = vunpack.c.l.b16 %v77
    %v201 = vunpack.c.h.b16 %v77
    %v202 = vunpack.c.l.b16 %v78
    %v203 = vunpack.c.h.b16 %v78
    %v204 = vunpack.c.l.b16 %v79
    %v205 = vunpack.c.h.b16 %v79
    %v206 = vunpack.c.l.b16 %v80
    %v207 = vunpack.c.h.b16 %v80
    %v208 = vunpack.c.l.b16 %v81
    %v209 = vunpack.c.h.b16 %v81
    %v210 = vunpack.c.l.b16 %v82
    %v211 = vunpack.c.h.b16 %v82
    %v212 = vunpack.c.l.b16 %v83
    %v213 = vunpack.c.h.b16 %v83
    %v214 = vunpack.c.l.b16 %v84
    %v215 = vunpack.c.h.b16 %v84
    %v216 = vunpack.c.l.b16 %v85
    %v217 = vunpack.c.h.b16 %v85
    %v218 = vunpack.c.l.b16 %v86
    %v219 = vunpack.c.h.b16 %v86
    %v220 = vunpack.c.l.b16 %v87
    %v221 = vunpack.c.h.b16 %v87
    %v222 = vunpack.c.l.b16 %v88
    %v223 = vunpack.c.h.b16 %v88
    %v224 = vunpack.c.l.b16 %v89
    %v225 = vunpack.c.h.b16 %v89
    %v226 = vunpack.c.l.b16 %v90
    %v227 = vunpack.c.h.b16 %v90
    %v228 = vunpack.c.l.b16 %v91
    %v229 = vunpack.c.h.b16 %v91
    %v230 = vunpack.c.l.b16 %v92
    %v231 = vunpack.c.h.b16 %v92
    %v232 = vunpack.c.l.b16 %v93
    %v233 = vunpack.c.h.b16 %v93
    %v234 = vunpack.c.l.b16 %v94
    %v235 = vunpack.c.h.b16 %v94
    %v236 = vunpack.c.l.b16 %v95
    %v237 = vunpack.c.h.b16 %v95
    %v238 = vunpack.c.l.b16 %v96
    %v239 = vunpack.c.h.b16 %v96
    %v240 = vunpack.c.l.b16 %v97
    %v241 = vunpack.c.h.b16 %v97
    %v242 = vunpack.c.l.b16 %v98
    %v243 = vunpack.c.h.b16 %v98
    %v244 = vunpack.c.l.b16 %v99
    %v245 = vunpack.c.h.b16 %v99
    %v246 = vunpack.c.l.b16 %v100
    %v247 = vunpack.c.h.b16 %v100
    %v248 = vunpack.c.l.b16 %v101
    %v249 = vunpack.c.h.b16 %v101
    %v250 = vpack.c.b16 %v188, %v186
    %v251 = vpack.c.b16 %v189, %v187
    %v252 = vpack.c.b16 %v192, %v190
    %v253 = vpack.c.b16 %v193, %v191
    %v254 = vpack.c.b16 %v196, %v194
    %v255 = vpack.c.b16 %v197, %v195
    %v256 = vpack.c.b16 %v200, %v198
    %v257 = vpack.c.b16 %v201, %v199
    %v258 = vpack.c.b16 %v204, %v202
    %v259 = vpack.c.b16 %v205, %v203
    %v260 = vpack.c.b16 %v208, %v206
    %v261 = vpack.c.b16 %v209, %v207
    %v262 = vpack.c.b16 %v212, %v210
    %v263 = vpack.c.b16 %v213, %v211
    %v264 = vpack.c.b16 %v216, %v214
    %v265 = vpack.c.b16 %v217, %v215
    %v266 = vpack.c.b16 %v220, %v218
    %v267 = vpack.c.b16 %v221, %v219
    %v268 = vpack.c.b16 %v224, %v222
    %v269 = vpack.c.b16 %v225, %v223
    %v270 = vpack.c.b16 %v228, %v226
    %v271 = vpack.c.b16 %v229, %v227
    %v272 = vpack.c.b16 %v232, %v230
    %v273 = vpack.c.b16 %v233, %v231
    %v274 = vpack.c.b16 %v236, %v234
    %v275 = vpack.c.b16 %v237, %v235
    %v276 = vpack.c.b16 %v240, %v238
    %v277 = vpack.c.b16 %v241, %v239
    %v278 = vpack.c.b16 %v244, %v242
    %v279 = vpack.c.b16 %v245, %v243
    %v280 = vpack.c.b16 %v248, %v246
    %v281 = vpack.c.b16 %v249, %v247
    %314 = vmatprep.subr.bf16.mxu0 %v251
    %315 = vmatpush1.bf16.msra.mxu0 %v250
    %316 = vmatprep.subr.bf16.mxu0 %v253
    %317 = vmatpush1.bf16.msra.mxu0 %v252
    %318 = vmatprep.subr.bf16.mxu0 %v255
    %319 = vmatpush1.bf16.msra.mxu0 %v254
    %320 = vmatprep.subr.bf16.mxu0 %v257
    %321 = vmatpush1.bf16.msra.mxu0 %v256
    %322 = vmatprep.subr.bf16.mxu0 %v259
    %323 = vmatpush1.bf16.msra.mxu0 %v258
    %324 = vmatprep.subr.bf16.mxu0 %v261
    %325 = vmatpush1.bf16.msra.mxu0 %v260
    %326 = vmatprep.subr.bf16.mxu0 %v263
    %327 = vmatpush1.bf16.msra.mxu0 %v262
    %328 = vmatprep.subr.bf16.mxu0 %v265
    %329 = vmatpush1.bf16.msra.mxu0 %v264
    %330 = vmatprep.subr.bf16.mxu0 %v267
    %331 = vmatpush1.bf16.msra.mxu0 %v266
    %332 = vmatprep.subr.bf16.mxu0 %v269
    %333 = vmatpush1.bf16.msra.mxu0 %v268
    %334 = vmatprep.subr.bf16.mxu0 %v271
    %335 = vmatpush1.bf16.msra.mxu0 %v270
    %336 = vmatprep.subr.bf16.mxu0 %v273
    %337 = vmatpush1.bf16.msra.mxu0 %v272
    %338 = vmatprep.subr.bf16.mxu0 %v275
    %339 = vmatpush1.bf16.msra.mxu0 %v274
    %340 = vmatprep.subr.bf16.mxu0 %v277
    %341 = vmatpush1.bf16.msra.mxu0 %v276
    %342 = vmatprep.subr.bf16.mxu0 %v279
    %343 = vmatpush1.bf16.msra.mxu0 %v278
    %344 = vmatprep.subr.bf16.mxu0 %v281
    %345 = vmatpush1.bf16.msra.mxu0 %v280
    %346 = vmatprep.mubr.bf16.mxu0 %v139
    %347 = vmatmul.mubr.bf16.gmra.mrb[0].mxu0 %v138
    %v348 = vpop.f32.mrb[0].mxu0
    %v349 = vadd.f32 %v107, %v348
    %v350 = vpop.f32.mrb[0].mxu0
    %v351 = vadd.f32 %v111, %v350
    %v352 = vpop.f32.mrb[0].mxu0
    %v353 = vadd.f32 %v107, %v352
    %v354 = vpop.f32.mrb[0].mxu0
    %v355 = vadd.f32 %v111, %v354
    %356 = vmatprep.mubr.bf16.mxu0 %v141
    %357 = vmatmul.mubr.bf16.gmra.mrb[0].mxu0 %v140
    %v358 = vpop.f32.mrb[0].mxu0
    %v359 = vadd.f32 %v107, %v358
    %v360 = vpop.f32.mrb[0].mxu0
    %v361 = vadd.f32 %v111, %v360
    %v362 = vpop.f32.mrb[0].mxu0
    %v363 = vadd.f32 %v107, %v362
    %v364 = vpop.f32.mrb[0].mxu0
    %v365 = vadd.f32 %v111, %v364
    %366 = vmatprep.mubr.bf16.mxu0 %v143
    %367 = vmatmul.mubr.bf16.gmra.mrb[0].mxu0 %v142
    %v368 = vpop.f32.mrb[0].mxu0
    %v369 = vadd.f32 %v107, %v368
    %v370 = vpop.f32.mrb[0].mxu0
    %v371 = vadd.f32 %v111, %v370
    %v372 = vpop.f32.mrb[0].mxu0
    %v373 = vadd.f32 %v107, %v372
    %v374 = vpop.f32.mrb[0].mxu0
    %v375 = vadd.f32 %v111, %v374
    %376 = vmatprep.mubr.bf16.mxu0 %v145
    %377 = vmatmul.mubr.bf16.gmra.mrb[0].mxu0 %v144
    %v378 = vpop.f32.mrb[0].mxu0
    %v379 = vadd.f32 %v107, %v378
    %v380 = vpop.f32.mrb[0].mxu0
    %v381 = vadd.f32 %v111, %v380
    %v382 = vpop.f32.mrb[0].mxu0
    %v383 = vadd.f32 %v107, %v382
    %v384 = vpop.f32.mrb[0].mxu0
    %v385 = vadd.f32 %v111, %v384
    %386 = vdwg.mxu0
    %v387 = vmax.f32 %v349, 0.0
    %v388 = vmax.f32 %v351, 0.0
    %v389 = vmax.f32 %v353, 0.0
    %v390 = vmax.f32 %v355, 0.0
    %v391 = vmax.f32 %v359, 0.0
    %v392 = vmax.f32 %v361, 0.0
    %v393 = vmax.f32 %v363, 0.0
    %v394 = vmax.f32 %v365, 0.0
    %v395 = vmax.f32 %v369, 0.0
    %v396 = vmax.f32 %v371, 0.0
    %v397 = vmax.f32 %v373, 0.0
    %v398 = vmax.f32 %v375, 0.0
    %v399 = vmax.f32 %v379, 0.0
    %v400 = vmax.f32 %v381, 0.0
    %v401 = vmax.f32 %v383, 0.0
    %v402 = vmax.f32 %v385, 0.0
    %v403 = vpack.c.bf16 %v389, %v387
    %v404 = vpack.c.bf16 %v390, %v388
    %v405 = vpack.c.bf16 %v393, %v391
    %v406 = vpack.c.bf16 %v394, %v392
    %v407 = vpack.c.bf16 %v397, %v395
    %v408 = vpack.c.bf16 %v398, %v396
    %v409 = vpack.c.bf16 %v401, %v399
    %v410 = vpack.c.bf16 %v402, %v400
    %v411 = vld [vmem:[#allocation7] sm:$0xff]
    %v412 = vld [vmem:[#allocation7 + $0x8] sm:$0xff]
    %v413 = vld [vmem:[#allocation7 + $0x10] sm:$0xff]
    %v414 = vld [vmem:[#allocation7 + $0x18] sm:$0xff]
    %v415 = vld [vmem:[#allocation7 + $0x20] sm:$0xff]
    %v416 = vld [vmem:[#allocation7 + $0x28] sm:$0xff]
    %v417 = vld [vmem:[#allocation7 + $0x30] sm:$0xff]
    %v418 = vld [vmem:[#allocation7 + $0x38] sm:$0xff]
    %v419 = vld [vmem:[#allocation7 + $0x40] sm:$0xff]
    %v420 = vld [vmem:[#allocation7 + $0x48] sm:$0xff]
    %v421 = vld [vmem:[#allocation7 + $0x50] sm:$0xff]
    %v422 = vld [vmem:[#allocation7 + $0x58] sm:$0xff]
    %v423 = vld [vmem:[#allocation7 + $0x60] sm:$0xff]
    %v424 = vld [vmem:[#allocation7 + $0x68] sm:$0xff]
    %v425 = vld [vmem:[#allocation7 + $0x70] sm:$0xff]
    %v426 = vld [vmem:[#allocation7 + $0x78] sm:$0xff]
    %v427 = vld [vmem:[#allocation7 + $0x80] sm:$0xff]
    %v428 = vld [vmem:[#allocation7 + $0x88] sm:$0xff]
    %v429 = vld [vmem:[#allocation7 + $0x90] sm:$0xff]
    %v430 = vld [vmem:[#allocation7 + $0x98] sm:$0xff]
    %v431 = vld [vmem:[#allocation7 + $0xa0] sm:$0xff]
    %v432 = vld [vmem:[#allocation7 + $0xa8] sm:$0xff]
    %v433 = vld [vmem:[#allocation7 + $0xb0] sm:$0xff]
    %v434 = vld [vmem:[#allocation7 + $0xb8] sm:$0xff]
    %v435 = vld [vmem:[#allocation7 + $0xc0] sm:$0xff]
    %v436 = vld [vmem:[#allocation7 + $0xc8] sm:$0xff]
    %v437 = vld [vmem:[#allocation7 + $0xd0] sm:$0xff]
    %v438 = vld [vmem:[#allocation7 + $0xd8] sm:$0xff]
    %v439 = vld [vmem:[#allocation7 + $0xe0] sm:$0xff]
    %v440 = vld [vmem:[#allocation7 + $0xe8] sm:$0xff]
    %v441 = vld [vmem:[#allocation7 + $0xf0] sm:$0xff]
    %v442 = vld [vmem:[#allocation7 + $0xf8] sm:$0xff]
    %v443 = vld [vmem:[%s4] sm:$0x3]
    %v445 = vlaneseq
    %v446 = vshrl.u32 %v445, 7
    %v447 = vsub.s32 0, %v446
    %v448 = vrot.slane %v443, %v447
    %v449 = vlaneseq
    %v450 = vshrl.u32 %v449, 7
    %v451 = vsub.s32 1, %v450
    %v452 = vrot.slane %v443, %v451
    %v487 = vunpack.c.l.b16 %v411
    %v488 = vunpack.c.h.b16 %v411
    %v489 = vunpack.c.l.b16 %v412
    %v490 = vunpack.c.h.b16 %v412
    %v491 = vunpack.c.l.b16 %v413
    %v492 = vunpack.c.h.b16 %v413
    %v493 = vunpack.c.l.b16 %v414
    %v494 = vunpack.c.h.b16 %v414
    %v495 = vunpack.c.l.b16 %v415
    %v496 = vunpack.c.h.b16 %v415
    %v497 = vunpack.c.l.b16 %v416
    %v498 = vunpack.c.h.b16 %v416
    %v499 = vunpack.c.l.b16 %v417
    %v500 = vunpack.c.h.b16 %v417
    %v501 = vunpack.c.l.b16 %v418
    %v502 = vunpack.c.h.b16 %v418
    %v503 = vunpack.c.l.b16 %v419
    %v504 = vunpack.c.h.b16 %v419
    %v505 = vunpack.c.l.b16 %v420
    %v506 = vunpack.c.h.b16 %v420
    %v507 = vunpack.c.l.b16 %v421
    %v508 = vunpack.c.h.b16 %v421
    %v509 = vunpack.c.l.b16 %v422
    %v510 = vunpack.c.h.b16 %v422
    %v511 = vunpack.c.l.b16 %v423
    %v512 = vunpack.c.h.b16 %v423
    %v513 = vunpack.c.l.b16 %v424
    %v514 = vunpack.c.h.b16 %v424
    %v515 = vunpack.c.l.b16 %v425
    %v516 = vunpack.c.h.b16 %v425
    %v517 = vunpack.c.l.b16 %v426
    %v518 = vunpack.c.h.b16 %v426
    %v519 = vunpack.c.l.b16 %v427
    %v520 = vunpack.c.h.b16 %v427
    %v521 = vunpack.c.l.b16 %v428
    %v522 = vunpack.c.h.b16 %v428
    %v523 = vunpack.c.l.b16 %v429
    %v524 = vunpack.c.h.b16 %v429
    %v525 = vunpack.c.l.b16 %v430
    %v526 = vunpack.c.h.b16 %v430
    %v527 = vunpack.c.l.b16 %v431
    %v528 = vunpack.c.h.b16 %v431
    %v529 = vunpack.c.l.b16 %v432
    %v530 = vunpack.c.h.b16 %v432
    %v531 = vunpack.c.l.b16 %v433
    %v532 = vunpack.c.h.b16 %v433
    %v533 = vunpack.c.l.b16 %v434
    %v534 = vunpack.c.h.b16 %v434
    %v535 = vunpack.c.l.b16 %v435
    %v536 = vunpack.c.h.b16 %v435
    %v537 = vunpack.c.l.b16 %v436
    %v538 = vunpack.c.h.b16 %v436
    %v539 = vunpack.c.l.b16 %v437
    %v540 = vunpack.c.h.b16 %v437
    %v541 = vunpack.c.l.b16 %v438
    %v542 = vunpack.c.h.b16 %v438
    %v543 = vunpack.c.l.b16 %v439
    %v544 = vunpack.c.h.b16 %v439
    %v545 = vunpack.c.l.b16 %v440
    %v546 = vunpack.c.h.b16 %v440
    %v547 = vunpack.c.l.b16 %v441
    %v548 = vunpack.c.h.b16 %v441
    %v549 = vunpack.c.l.b16 %v442
    %v550 = vunpack.c.h.b16 %v442
    %v551 = vpack.c.b16 %v489, %v487
    %v552 = vpack.c.b16 %v490, %v488
    %v553 = vpack.c.b16 %v493, %v491
    %v554 = vpack.c.b16 %v494, %v492
    %v555 = vpack.c.b16 %v497, %v495
    %v556 = vpack.c.b16 %v498, %v496
    %v557 = vpack.c.b16 %v501, %v499
    %v558 = vpack.c.b16 %v502, %v500
    %v559 = vpack.c.b16 %v505, %v503
    %v560 = vpack.c.b16 %v506, %v504
    %v561 = vpack.c.b16 %v509, %v507
    %v562 = vpack.c.b16 %v510, %v508
    %v563 = vpack.c.b16 %v513, %v511
    %v564 = vpack.c.b16 %v514, %v512
    %v565 = vpack.c.b16 %v517, %v515
    %v566 = vpack.c.b16 %v518, %v516
    %v567 = vpack.c.b16 %v521, %v519
    %v568 = vpack.c.b16 %v522, %v520
    %v569 = vpack.c.b16 %v525, %v523
    %v570 = vpack.c.b16 %v526, %v524
    %v571 = vpack.c.b16 %v529, %v527
    %v572 = vpack.c.b16 %v530, %v528
    %v573 = vpack.c.b16 %v533, %v531
    %v574 = vpack.c.b16 %v534, %v532
    %v575 = vpack.c.b16 %v537, %v535
    %v576 = vpack.c.b16 %v538, %v536
    %v577 = vpack.c.b16 %v541, %v539
    %v578 = vpack.c.b16 %v542, %v540
    %v579 = vpack.c.b16 %v545, %v543
    %v580 = vpack.c.b16 %v546, %v544
    %v581 = vpack.c.b16 %v549, %v547
    %v582 = vpack.c.b16 %v550, %v548
    %615 = vmatprep.subr.bf16.mxu0 %v552
    %616 = vmatpush1.bf16.msra.mxu0 %v551
    %617 = vmatprep.subr.bf16.mxu0 %v554
    %618 = vmatpush1.bf16.msra.mxu0 %v553
    %619 = vmatprep.subr.bf16.mxu0 %v556
    %620 = vmatpush1.bf16.msra.mxu0 %v555
    %621 = vmatprep.subr.bf16.mxu0 %v558
    %622 = vmatpush1.bf16.msra.mxu0 %v557
    %623 = vmatprep.subr.bf16.mxu0 %v560
    %624 = vmatpush1.bf16.msra.mxu0 %v559
    %625 = vmatprep.subr.bf16.mxu0 %v562
    %626 = vmatpush1.bf16.msra.mxu0 %v561
    %627 = vmatprep.subr.bf16.mxu0 %v564
    %628 = vmatpush1.bf16.msra.mxu0 %v563
    %629 = vmatprep.subr.bf16.mxu0 %v566
    %630 = vmatpush1.bf16.msra.mxu0 %v565
    %631 = vmatprep.subr.bf16.mxu0 %v568
    %632 = vmatpush1.bf16.msra.mxu0 %v567
    %633 = vmatprep.subr.bf16.mxu0 %v570
    %634 = vmatpush1.bf16.msra.mxu0 %v569
    %635 = vmatprep.subr.bf16.mxu0 %v572
    %636 = vmatpush1.bf16.msra.mxu0 %v571
    %637 = vmatprep.subr.bf16.mxu0 %v574
    %638 = vmatpush1.bf16.msra.mxu0 %v573
    %639 = vmatprep.subr.bf16.mxu0 %v576
    %640 = vmatpush1.bf16.msra.mxu0 %v575
    %641 = vmatprep.subr.bf16.mxu0 %v578
    %642 = vmatpush1.bf16.msra.mxu0 %v577
    %643 = vmatprep.subr.bf16.mxu0 %v580
    %644 = vmatpush1.bf16.msra.mxu0 %v579
    %645 = vmatprep.subr.bf16.mxu0 %v582
    %646 = vmatpush1.bf16.msra.mxu0 %v581
    %647 = vmatprep.mubr.bf16.mxu0 %v404
    %648 = vmatmul.mubr.bf16.gmra.mrb[0].mxu0 %v403
    %v649 = vpop.f32.mrb[0].mxu0
    %v650 = vadd.f32 %v448, %v649
    %v651 = vpop.f32.mrb[0].mxu0
    %v652 = vadd.f32 %v452, %v651
    %v653 = vpop.f32.mrb[0].mxu0
    %v654 = vadd.f32 %v448, %v653
    %v655 = vpop.f32.mrb[0].mxu0
    %v656 = vadd.f32 %v452, %v655
    %657 = vmatprep.mubr.bf16.mxu0 %v406
    %658 = vmatmul.mubr.bf16.gmra.mrb[0].mxu0 %v405
    %v659 = vpop.f32.mrb[0].mxu0
    %v660 = vadd.f32 %v448, %v659
    %v661 = vpop.f32.mrb[0].mxu0
    %v662 = vadd.f32 %v452, %v661
    %v663 = vpop.f32.mrb[0].mxu0
    %v664 = vadd.f32 %v448, %v663
    %v665 = vpop.f32.mrb[0].mxu0
    %v666 = vadd.f32 %v452, %v665
    %667 = vmatprep.mubr.bf16.mxu0 %v408
    %668 = vmatmul.mubr.bf16.gmra.mrb[0].mxu0 %v407
    %v669 = vpop.f32.mrb[0].mxu0
    %v670 = vadd.f32 %v448, %v669
    %v671 = vpop.f32.mrb[0].mxu0
    %v672 = vadd.f32 %v452, %v671
    %v673 = vpop.f32.mrb[0].mxu0
    %v674 = vadd.f32 %v448, %v673
    %v675 = vpop.f32.mrb[0].mxu0
    %v676 = vadd.f32 %v452, %v675
    %677 = vmatprep.mubr.bf16.mxu0 %v410
    %678 = vmatmul.mubr.bf16.gmra.mrb[0].mxu0 %v409
    %v679 = vpop.f32.mrb[0].mxu0
    %v680 = vadd.f32 %v448, %v679
    %v681 = vpop.f32.mrb[0].mxu0
    %v682 = vadd.f32 %v452, %v681
    %v683 = vpop.f32.mrb[0].mxu0
    %v684 = vadd.f32 %v448, %v683
    %v685 = vpop.f32.mrb[0].mxu0
    %v686 = vadd.f32 %v452, %v685
    %687 = vdwg.mxu0
    %688 = vst [vmem:[#allocation8] sm:$0xff] %v650
    %689 = vst [vmem:[#allocation8 + $0x8] sm:$0xff] %v652
    %690 = vst [vmem:[#allocation8 + $0x10] sm:$0xff] %v654
    %691 = vst [vmem:[#allocation8 + $0x18] sm:$0xff] %v656
    %692 = vst [vmem:[#allocation8 + $0x20] sm:$0xff] %v660
    %693 = vst [vmem:[#allocation8 + $0x28] sm:$0xff] %v662
    %694 = vst [vmem:[#allocation8 + $0x30] sm:$0xff] %v664
    %695 = vst [vmem:[#allocation8 + $0x38] sm:$0xff] %v666
    %696 = vst [vmem:[#allocation8 + $0x40] sm:$0xff] %v670
    %697 = vst [vmem:[#allocation8 + $0x48] sm:$0xff] %v672
    %698 = vst [vmem:[#allocation8 + $0x50] sm:$0xff] %v674
    %699 = vst [vmem:[#allocation8 + $0x58] sm:$0xff] %v676
    %700 = vst [vmem:[#allocation8 + $0x60] sm:$0xff] %v680
    %701 = vst [vmem:[#allocation8 + $0x68] sm:$0xff] %v682
    %702 = vst [vmem:[#allocation8 + $0x70] sm:$0xff] %v684
    %703 = vst [vmem:[#allocation8 + $0x78] sm:$0xff] %v686
    // Predicated region
    $region34: #{tpu_custom_call.1} parent=1 // pred_check
      _
    $region35: #{tpu_custom_call.1} parent=1 // pred_check_branch
      %705 = sbr.rel (0) target = $region37
    $region36: #{tpu_custom_call.1} parent=1 // pred_region
      %s707 = ssub.s32 2048, 2048
      %708 = vsyncadd [#allocation4], %s707
      %s709 = sshll.u32 [#allocation8], 4
      %s710 = int_to_ptr.vmem [resolvable:$true] %s709
      %715 = dma.vmem_to_hbm [thread:$0]  %s710, 2048, %s5, [#allocation4], 256, 256, 16
    $region37: #{tpu_custom_call.1} parent=1 // pred_fallthru
      _
    // Predicated region
    $region38: #{tpu_custom_call.1} parent=1 // pred_check
      _
    $region39: #{tpu_custom_call.1} parent=1 // pred_check_branch
      %717 = sbr.rel (0) target = $region41
    $region40: #{tpu_custom_call.1} parent=1 // pred_region
      %718 = dma.done [#allocation4], 2048
    $region41: #{tpu_custom_call.1} parent=1 // pred_fallthru
      _
    %719 = vsyncpa [#allocation3], 1
    %720 = vsyncpa [#allocation6], 1
    %721 = vsyncpa [#allocation4], 1

</llo_original>
